<compile_context>
chip_gen: v5e
topology: v5e:2x2
jax: 0.10.0
libtpu: 0.0.40
codegen_flags: <defaults>
</compile_context>

<pallas_src>
import math
import functools

import jax
import jax.numpy as jnp
from jax.experimental import pallas as pl
from jax.experimental.pallas import tpu as pltpu


def _decoder_kernel(q_ref, k_ref, v_ref,
                    wqt_ref, wkt_ref, wvt_ref,
                    bq_ref, bk_ref, bv_ref,
                    wot_ref, bo_ref,
                    gamma_ref, beta_ref,
                    o_ref,
                    q_scr, k_scr, v_scr, hc_scr,
                    *, nhead, eps, flatten, use_slab):
    Bt, Lq, E = q_ref.shape
    Lk = k_ref.shape[1]
    hd = E // nhead
    scale = 1.0 / math.sqrt(hd)
    cdt = wqt_ref.dtype            # MXU operand dtype (weights pre-cast in wrapper)
    f32 = jnp.float32

    # ---- input projections: x @ W_t + b, f32 accumulation, stored to VMEM scratch ----
    def project(x_ref, w_ref, b_ref, out_scr, L, do_scale):
        if flatten:
            x2d = x_ref[...].reshape(Bt * L, E).astype(cdt)
            y = jnp.dot(x2d, w_ref[...], preferred_element_type=f32) + b_ref[...]
            if do_scale:
                y = y * scale
            out_scr[...] = y.astype(cdt).reshape(Bt, L, E)
        else:
            x3d = x_ref[...].astype(cdt)
            y = jnp.einsum('ble,ef->blf', x3d, w_ref[...],
                           preferred_element_type=f32) + b_ref[...]
            if do_scale:
                y = y * scale
            out_scr[...] = y.astype(cdt)

    project(q_ref, wqt_ref, bq_ref, q_scr, Lq, True)   # q scaled by 1/sqrt(head_dim)
    project(k_ref, wkt_ref, bk_ref, k_scr, Lk, False)
    project(v_ref, wvt_ref, bv_ref, v_scr, Lk, False)

    if not use_slab:
        # Fold path: seed the f32 accumulator with residual + output-projection bias.
        hc_scr[...] = q_ref[...].astype(f32) + bo_ref[...]

    # ---- per-head attention ----
    for h in range(nhead):
        lo = h * hd
        hi = lo + hd
        qh = q_scr[:, :, lo:hi]                       # (Bt, Lq, hd) ref-slice loads
        kh = k_scr[:, :, lo:hi]
        vh = v_scr[:, :, lo:hi]

        s = jnp.einsum('bqd,bkd->bqk', qh, kh,
                       preferred_element_type=f32)    # (Bt, Lq, Lk)
        s = s - jnp.max(s, axis=-1, keepdims=True)
        p = jnp.exp(s)
        p = p * pl.reciprocal(jnp.sum(p, axis=-1, keepdims=True), approx=False)

        ho = jnp.einsum('bqk,bkd->bqd', p.astype(cdt), vh,
                        preferred_element_type=f32)   # (Bt, Lq, hd) f32

        if use_slab:
            # Lane-aligned column write; single full-K output projection after the loop.
            hc_scr[:, :, lo:hi] = ho.astype(cdt)
        else:
            # concat(heads) @ Wo^T == sum_h head_h @ Wo^T[h*hd:(h+1)*hd, :]
            wo_slice = wot_ref[lo:hi, :]              # only (hd, E) live
            if flatten:
                c = jnp.dot(ho.reshape(Bt * Lq, hd).astype(cdt), wo_slice,
                            preferred_element_type=f32)
                hc_scr[...] += c.reshape(Bt, Lq, E)
            else:
                hc_scr[...] += jnp.einsum('bqd,de->bqe', ho.astype(cdt), wo_slice,
                                          preferred_element_type=f32)

    # ---- output projection / residual ----
    if use_slab:
        if flatten:
            proj = jnp.dot(hc_scr[...].reshape(Bt * Lq, E), wot_ref[...],
                           preferred_element_type=f32).reshape(Bt, Lq, E)
        else:
            proj = jnp.einsum('ble,ef->blf', hc_scr[...], wot_ref[...],
                              preferred_element_type=f32)
        src = q_ref[...].astype(f32) + proj + bo_ref[...]
    else:
        src = hc_scr[...]                             # residual + bias already folded in

    # ---- LayerNorm over the feature dim (f32 math) ----
    mean = jnp.mean(src, axis=-1, keepdims=True)
    centered = src - mean
    var = jnp.mean(centered * centered, axis=-1, keepdims=True)
    normed = centered * jax.lax.rsqrt(var + eps)
    o_ref[...] = (normed * gamma_ref[...] + beta_ref[...]).astype(o_ref.dtype)


def _tpu_config():
    """Best-effort (vmem_capacity_bytes, multi_tensorcore) with safe fallbacks."""
    vmem = None
    try:
        vmem = int(pltpu.get_tpu_info().vmem_capacity_bytes)
    except Exception:
        vmem = None
    kind = ""
    try:
        kind = jax.devices()[0].device_kind.lower()
    except Exception:
        pass
    if vmem is None:
        vmem = 64 * (1 << 20)          # conservative: v7x per-TensorCore VMEM
    single_tc = any(g in kind for g in ("v2", "v3", "v4", "v5", "v6"))
    multi_tc = not single_tc           # v7x-class (or unknown): assume 2 TCs/chip
    return vmem, multi_tc


def _choose_block_b(B, Lq, Lk, E, in_item, c_item, use_slab, vmem_cap, multi_tc):
    """Largest batch tile that fits the per-step VMEM working set.
    On multi-TensorCore chips (v7x) keep >= 2 grid steps so the 'parallel'
    batch axis can shard across cores; on v5e/v6e (single TC, sequential grid)
    simply take the largest block that fits."""
    # Block-size-independent residents: double-buffered weights + biases.
    fixed = 2 * (4 * E * E * c_item + 6 * E * 4)
    budget = max(int(vmem_cap * 0.55) - fixed, 2 * (1 << 20))
    per_b = (
        2 * (Lq + 2 * Lk) * E * in_item          # double-buffered q/k/v input blocks
        + 2 * Lq * E * in_item                   # double-buffered output block
        + (Lq + 2 * Lk) * E * c_item             # Q/K/V scratch
        + Lq * E * (c_item if use_slab else 4)   # head slab / f32 accumulator scratch
        + max(Lq, Lk) * E * 4                    # transient f32 projection value
        + 2 * Lq * Lk * 4                        # scores + probs (f32)
        + 2 * Lq * E * 4                         # out-proj / layernorm temporaries
    )
    divisors = [d for d in range(1, B + 1) if B % d == 0]
    fitting = [d for d in divisors if d * per_b <= budget] or [1]
    if multi_tc and B > 1:
        fitting = [d for d in fitting if B // d >= 2] or fitting
    return fitting[-1]


def transformer_decoder_simplified(qsrc, ksrc, vsrc, params, *, nhead, eps=1e-5,
                                   block_b=None, use_bf16_matmul=False):
    """qsrc: (B, Lq, E); ksrc, vsrc: (B, Lk, E). Returns (B, Lq, E)."""
    B, Lq, E = qsrc.shape
    _, Lk, _ = ksrc.shape
    assert E % nhead == 0
    hd = E // nhead

    # Compute dtype for MXU operands (weights + activation casts).
    cdt = jnp.bfloat16 if (use_bf16_matmul or qsrc.dtype == jnp.bfloat16) else qsrc.dtype
    in_item = jnp.dtype(qsrc.dtype).itemsize
    c_item = jnp.dtype(cdt).itemsize

    # One-time transposes/casts so the kernel computes x @ W directly.
    wq_t = params["wq"].T.astype(cdt)
    wk_t = params["wk"].T.astype(cdt)
    wv_t = params["wv"].T.astype(cdt)
    wo_t = params["wo"].T.astype(cdt)
    bq = params["bq"].astype(jnp.float32)
    bk = params["bk"].astype(jnp.float32)
    bv = params["bv"].astype(jnp.float32)
    bo = params["bo"].astype(jnp.float32)
    gamma = params["gamma"].astype(jnp.float32)
    beta = params["beta"].astype(jnp.float32)

    # Slab path only when the head write is lane-aligned (head_dim multiple of 128).
    use_slab = (hd % 128 == 0)
    # Flatten (Bt,L,E)->(Bt*L,E) only when it is a pure view (no relayout copy).
    pack = 32 // min(in_item, c_item)
    flatten = (Lq % pack == 0) and (Lk % pack == 0)

    vmem_cap, multi_tc = _tpu_config()
    if block_b is None:
        block_b = _choose_block_b(B, Lq, Lk, E, in_item, c_item, use_slab,
                                  vmem_cap, multi_tc)
    assert B % block_b == 0, "block_b must divide B"
    grid = (B // block_b,)
    vmem_limit = min(int(vmem_cap * 0.75), 100 * (1 << 20))

    seq_q = pl.BlockSpec((block_b, Lq, E), lambda b: (b, 0, 0))
    seq_k = pl.BlockSpec((block_b, Lk, E), lambda b: (b, 0, 0))
    # Weights/biases use constant index maps; single-buffering them (pl.Buffered(1))
    # would reclaim ~4*E^2*itemsize of VMEM but is left off for lowering safety.
    mat = pl.BlockSpec((E, E), lambda b: (0, 0))
    vec = pl.BlockSpec((1, E), lambda b: (0, 0))

    kernel = functools.partial(_decoder_kernel, nhead=nhead, eps=eps,
                               flatten=flatten, use_slab=use_slab)

    return pl.pallas_call(
        kernel,
        out_shape=jax.ShapeDtypeStruct((B, Lq, E), qsrc.dtype),
        grid=grid,
        in_specs=[
            seq_q, seq_k, seq_k,
            mat, mat, mat,
            vec, vec, vec,
            mat, vec,
            vec, vec,
        ],
        out_specs=seq_q,
        scratch_shapes=[
            pltpu.VMEM((block_b, Lq, E), cdt),                              # Q
            pltpu.VMEM((block_b, Lk, E), cdt),                              # K
            pltpu.VMEM((block_b, Lk, E), cdt),                              # V
            pltpu.VMEM((block_b, Lq, E), cdt if use_slab else jnp.float32),  # heads/acc
        ],
        compiler_params=pltpu.CompilerParams(
            dimension_semantics=("parallel",),
            vmem_limit_bytes=vmem_limit),
    )(qsrc, ksrc, vsrc, wq_t, wk_t, wv_t, bq, bk, bv, wo_t, bo, gamma, beta)


def init_params(key, d_model):
    """Deterministic synthetic parameters (shapes match nn.MultiheadAttention + LayerNorm).
    Weights are stored in PyTorch (out_features, in_features) convention; the wrapper
    transposes them once before handing them to the kernel."""
    ks = jax.random.split(key, 5)
    # in_proj_weight is (3*E, E) in PyTorch; split into the three projections.
    bound_in = math.sqrt(6.0 / (3 * d_model + d_model))  # xavier_uniform_ on (3E, E)
    in_proj = jax.random.uniform(ks[0], (3 * d_model, d_model),
                                 minval=-bound_in, maxval=bound_in, dtype=jnp.float32)
    wq, wk, wv = in_proj[:d_model], in_proj[d_model:2 * d_model], in_proj[2 * d_model:]
    bq = jnp.zeros((1, d_model), jnp.float32)   # constant_(in_proj_bias, 0.)
    bk = jnp.zeros((1, d_model), jnp.float32)
    bv = jnp.zeros((1, d_model), jnp.float32)
    # out_proj: Linear(E, E) default-style init, bias zeroed by MHA reset.
    bound_out = 1.0 / math.sqrt(d_model)
    wo = jax.random.uniform(ks[1], (d_model, d_model),
                            minval=-bound_out, maxval=bound_out, dtype=jnp.float32)
    bo = jnp.zeros((1, d_model), jnp.float32)
    # LayerNorm affine params (default ones / zeros).
    gamma = jnp.ones((1, d_model), jnp.float32)
    beta = jnp.zeros((1, d_model), jnp.float32)
    return dict(wq=wq, wk=wk, wv=wv, bq=bq, bk=bk, bv=bv,
                wo=wo, bo=bo, gamma=gamma, beta=beta)


if __name__ == "__main__":
    d_model, nhead = 32, 4
    B, Lq, Lk = 2, 8, 8

    key = jax.random.PRNGKey(0)
    kq, kk, kv, kp = jax.random.split(key, 4)
    qsrc = jax.random.normal(kq, (B, Lq, d_model), dtype=jnp.float32)
    ksrc = jax.random.normal(kk, (B, Lk, d_model), dtype=jnp.float32)
    vsrc = jax.random.normal(kv, (B, Lk, d_model), dtype=jnp.float32)
    params = init_params(kp, d_model)

    out = transformer_decoder_simplified(qsrc, ksrc, vsrc, params,
                                         nhead=nhead, eps=1e-5)
    jax.block_until_ready(out)
    assert out.shape == (B, Lq, d_model)
    print("KERNEL_OK")
</pallas_src>

<mosaic_0001>
module attributes {stable_mosaic.version = 11 : i64} {
  func.func @_decoder_kernel(%arg0: i32, %arg1: memref<1x8x32xf32, #tpu.memory_space<vmem>>, %arg2: memref<1x8x32xf32, #tpu.memory_space<vmem>>, %arg3: memref<1x8x32xf32, #tpu.memory_space<vmem>>, %arg4: memref<32x32xf32, #tpu.memory_space<vmem>>, %arg5: memref<32x32xf32, #tpu.memory_space<vmem>>, %arg6: memref<32x32xf32, #tpu.memory_space<vmem>>, %arg7: memref<1x32xf32, #tpu.memory_space<vmem>>, %arg8: memref<1x32xf32, #tpu.memory_space<vmem>>, %arg9: memref<1x32xf32, #tpu.memory_space<vmem>>, %arg10: memref<32x32xf32, #tpu.memory_space<vmem>>, %arg11: memref<1x32xf32, #tpu.memory_space<vmem>>, %arg12: memref<1x32xf32, #tpu.memory_space<vmem>>, %arg13: memref<1x32xf32, #tpu.memory_space<vmem>>, %arg14: memref<1x8x32xf32, #tpu.memory_space<vmem>>, %arg15: memref<1x8x32xf32, #tpu.memory_space<vmem>>, %arg16: memref<1x8x32xf32, #tpu.memory_space<vmem>>, %arg17: memref<1x8x32xf32, #tpu.memory_space<vmem>>, %arg18: memref<1x8x32xf32, #tpu.memory_space<vmem>>) attributes {dimension_semantics = [#tpu.dimension_semantics<parallel>], iteration_bounds = array<i64: 2>, scalar_prefetch = 0 : i64, scratch_operands = 4 : i64, tpu.core_type = #tpu.core_type<tc>, window_params = [{transform_indices = @transform_0, window_bounds = array<i64: 1, 8, 32>}, {transform_indices = @transform_1, window_bounds = array<i64: 1, 8, 32>}, {transform_indices = @transform_2, window_bounds = array<i64: 1, 8, 32>}, {pipeline_mode = #tpu.pipeline_mode<synchronous>, transform_indices = @transform_3, window_bounds = array<i64: 32, 32>}, {pipeline_mode = #tpu.pipeline_mode<synchronous>, transform_indices = @transform_4, window_bounds = array<i64: 32, 32>}, {pipeline_mode = #tpu.pipeline_mode<synchronous>, transform_indices = @transform_5, window_bounds = array<i64: 32, 32>}, {pipeline_mode = #tpu.pipeline_mode<synchronous>, transform_indices = @transform_6, window_bounds = array<i64: 1, 32>}, {pipeline_mode = #tpu.pipeline_mode<synchronous>, transform_indices = @transform_7, window_bounds = array<i64: 1, 32>}, {pipeline_mode = #tpu.pipeline_mode<synchronous>, transform_indices = @transform_8, window_bounds = array<i64: 1, 32>}, {pipeline_mode = #tpu.pipeline_mode<synchronous>, transform_indices = @transform_9, window_bounds = array<i64: 32, 32>}, {pipeline_mode = #tpu.pipeline_mode<synchronous>, transform_indices = @transform_10, window_bounds = array<i64: 1, 32>}, {pipeline_mode = #tpu.pipeline_mode<synchronous>, transform_indices = @transform_11, window_bounds = array<i64: 1, 32>}, {pipeline_mode = #tpu.pipeline_mode<synchronous>, transform_indices = @transform_12, window_bounds = array<i64: 1, 32>}, {transform_indices = @transform_13, window_bounds = array<i64: 1, 8, 32>}]} {
    %c0 = arith.constant 0 : index
    %c0_0 = arith.constant 0 : index
    %c0_1 = arith.constant 0 : index
    %0 = vector.load %arg1[%c0, %c0_0, %c0_1] : memref<1x8x32xf32, #tpu.memory_space<vmem>>, vector<1x8x32xf32>
    %1 = vector.shape_cast %0 : vector<1x8x32xf32> to vector<8x32xf32>
    %c0_2 = arith.constant 0 : index
    %c0_3 = arith.constant 0 : index
    %2 = vector.load %arg4[%c0_2, %c0_3] : memref<32x32xf32, #tpu.memory_space<vmem>>, vector<32x32xf32>
    %cst = arith.constant dense<0.000000e+00> : vector<8x32xf32>
    %3 = tpu.matmul %1, %2, %cst {dimension_numbers = #tpu.dot_dimension_numbers<[1], [0], [0], [1], [0, 0, 1, 1], [], []>} : vector<8x32xf32>, vector<32x32xf32>, vector<8x32xf32> -> vector<8x32xf32>
    %c0_4 = arith.constant 0 : index
    %c0_5 = arith.constant 0 : index
    %4 = vector.load %arg7[%c0_4, %c0_5] : memref<1x32xf32, #tpu.memory_space<vmem>>, vector<1x32xf32>
    %5 = vector.broadcast %4 : vector<1x32xf32> to vector<8x32xf32>
    %6 = arith.addf %3, %5 : vector<8x32xf32>
    %cst_6 = arith.constant 0.353553385 : f32
    %7 = vector.broadcast %cst_6 : f32 to vector<8x32xf32>
    %8 = arith.mulf %6, %7 : vector<8x32xf32>
    %9 = vector.shape_cast %8 : vector<8x32xf32> to vector<1x8x32xf32>
    %c0_7 = arith.constant 0 : index
    %c0_8 = arith.constant 0 : index
    %c0_9 = arith.constant 0 : index
    %10 = vector.load %arg15[%c0_7, %c0_8, %c0_9] : memref<1x8x32xf32, #tpu.memory_space<vmem>>, vector<1x8x32xf32>
    tpu.vector_store %arg15[%c0_7, %c0_8, %c0_9], %9 {strides = array<i32>} : memref<1x8x32xf32, #tpu.memory_space<vmem>>, vector<1x8x32xf32>,
    %c0_10 = arith.constant 0 : index
    %c0_11 = arith.constant 0 : index
    %c0_12 = arith.constant 0 : index
    %11 = vector.load %arg2[%c0_10, %c0_11, %c0_12] : memref<1x8x32xf32, #tpu.memory_space<vmem>>, vector<1x8x32xf32>
    %12 = vector.shape_cast %11 : vector<1x8x32xf32> to vector<8x32xf32>
    %c0_13 = arith.constant 0 : index
    %c0_14 = arith.constant 0 : index
    %13 = vector.load %arg5[%c0_13, %c0_14] : memref<32x32xf32, #tpu.memory_space<vmem>>, vector<32x32xf32>
    %cst_15 = arith.constant dense<0.000000e+00> : vector<8x32xf32>
    %14 = tpu.matmul %12, %13, %cst_15 {dimension_numbers = #tpu.dot_dimension_numbers<[1], [0], [0], [1], [0, 0, 1, 1], [], []>} : vector<8x32xf32>, vector<32x32xf32>, vector<8x32xf32> -> vector<8x32xf32>
    %c0_16 = arith.constant 0 : index
    %c0_17 = arith.constant 0 : index
    %15 = vector.load %arg8[%c0_16, %c0_17] : memref<1x32xf32, #tpu.memory_space<vmem>>, vector<1x32xf32>
    %16 = vector.broadcast %15 : vector<1x32xf32> to vector<8x32xf32>
    %17 = arith.addf %14, %16 : vector<8x32xf32>
    %18 = vector.shape_cast %17 : vector<8x32xf32> to vector<1x8x32xf32>
    %c0_18 = arith.constant 0 : index
    %c0_19 = arith.constant 0 : index
    %c0_20 = arith.constant 0 : index
    %19 = vector.load %arg16[%c0_18, %c0_19, %c0_20] : memref<1x8x32xf32, #tpu.memory_space<vmem>>, vector<1x8x32xf32>
    tpu.vector_store %arg16[%c0_18, %c0_19, %c0_20], %18 {strides = array<i32>} : memref<1x8x32xf32, #tpu.memory_space<vmem>>, vector<1x8x32xf32>,
    %c0_21 = arith.constant 0 : index
    %c0_22 = arith.constant 0 : index
    %c0_23 = arith.constant 0 : index
    %20 = vector.load %arg3[%c0_21, %c0_22, %c0_23] : memref<1x8x32xf32, #tpu.memory_space<vmem>>, vector<1x8x32xf32>
    %21 = vector.shape_cast %20 : vector<1x8x32xf32> to vector<8x32xf32>
    %c0_24 = arith.constant 0 : index
    %c0_25 = arith.constant 0 : index
    %22 = vector.load %arg6[%c0_24, %c0_25] : memref<32x32xf32, #tpu.memory_space<vmem>>, vector<32x32xf32>
    %cst_26 = arith.constant dense<0.000000e+00> : vector<8x32xf32>
    %23 = tpu.matmul %21, %22, %cst_26 {dimension_numbers = #tpu.dot_dimension_numbers<[1], [0], [0], [1], [0, 0, 1, 1], [], []>} : vector<8x32xf32>, vector<32x32xf32>, vector<8x32xf32> -> vector<8x32xf32>
    %c0_27 = arith.constant 0 : index
    %c0_28 = arith.constant 0 : index
    %24 = vector.load %arg9[%c0_27, %c0_28] : memref<1x32xf32, #tpu.memory_space<vmem>>, vector<1x32xf32>
    %25 = vector.broadcast %24 : vector<1x32xf32> to vector<8x32xf32>
    %26 = arith.addf %23, %25 : vector<8x32xf32>
    %27 = vector.shape_cast %26 : vector<8x32xf32> to vector<1x8x32xf32>
    %c0_29 = arith.constant 0 : index
    %c0_30 = arith.constant 0 : index
    %c0_31 = arith.constant 0 : index
    %28 = vector.load %arg17[%c0_29, %c0_30, %c0_31] : memref<1x8x32xf32, #tpu.memory_space<vmem>>, vector<1x8x32xf32>
    tpu.vector_store %arg17[%c0_29, %c0_30, %c0_31], %27 {strides = array<i32>} : memref<1x8x32xf32, #tpu.memory_space<vmem>>, vector<1x8x32xf32>,
    %c0_32 = arith.constant 0 : index
    %c0_33 = arith.constant 0 : index
    %c0_34 = arith.constant 0 : index
    %29 = vector.load %arg1[%c0_32, %c0_33, %c0_34] : memref<1x8x32xf32, #tpu.memory_space<vmem>>, vector<1x8x32xf32>
    %c0_35 = arith.constant 0 : index
    %c0_36 = arith.constant 0 : index
    %30 = vector.load %arg11[%c0_35, %c0_36] : memref<1x32xf32, #tpu.memory_space<vmem>>, vector<1x32xf32>
    %31 = vector.shape_cast %30 : vector<1x32xf32> to vector<1x1x32xf32>
    %32 = vector.broadcast %31 : vector<1x1x32xf32> to vector<1x8x32xf32>
    %33 = arith.addf %29, %32 : vector<1x8x32xf32>
    %c0_37 = arith.constant 0 : index
    %c0_38 = arith.constant 0 : index
    %c0_39 = arith.constant 0 : index
    %34 = vector.load %arg18[%c0_37, %c0_38, %c0_39] : memref<1x8x32xf32, #tpu.memory_space<vmem>>, vector<1x8x32xf32>
    tpu.vector_store %arg18[%c0_37, %c0_38, %c0_39], %33 {strides = array<i32>} : memref<1x8x32xf32, #tpu.memory_space<vmem>>, vector<1x8x32xf32>,
    %c0_40 = arith.constant 0 : index
    %c0_41 = arith.constant 0 : index
    %c0_42 = arith.constant 0 : index
    %35 = vector.load %arg15[%c0_40, %c0_41, %c0_42] : memref<1x8x32xf32, #tpu.memory_space<vmem>>, vector<1x8x8xf32>
    %c0_43 = arith.constant 0 : index
    %c0_44 = arith.constant 0 : index
    %c0_45 = arith.constant 0 : index
    %36 = vector.load %arg16[%c0_43, %c0_44, %c0_45] : memref<1x8x32xf32, #tpu.memory_space<vmem>>, vector<1x8x8xf32>
    %c0_46 = arith.constant 0 : index
    %c0_47 = arith.constant 0 : index
    %c0_48 = arith.constant 0 : index
    %37 = vector.load %arg17[%c0_46, %c0_47, %c0_48] : memref<1x8x32xf32, #tpu.memory_space<vmem>>, vector<1x8x8xf32>
    "tpu.trace_start"() <{level = 10 : i32, message = "bqd,bkd->bqk"}> : () -> ()
    %cst_49 = arith.constant dense<0.000000e+00> : vector<1x8x8xf32>
    %38 = tpu.matmul %35, %36, %cst_49 {dimension_numbers = #tpu.dot_dimension_numbers<[2], [2], [1], [1], [0, 0, 0, 1, 1, 1], [0], [0]>} : vector<1x8x8xf32>, vector<1x8x8xf32>, vector<1x8x8xf32> -> vector<1x8x8xf32>
    "tpu.trace_stop"() : () -> ()
    %cst_50 = arith.constant dense<0xFF800000> : vector<1x8xf32>
    %39 = vector.multi_reduction <maximumf>, %38, %cst_50 [2] : vector<1x8x8xf32> to vector<1x8xf32>
    %40 = vector.shape_cast %39 : vector<1x8xf32> to vector<1x8x1xf32>
    %41 = vector.broadcast %40 : vector<1x8x1xf32> to vector<1x8x8xf32>
    %42 = arith.subf %38, %41 : vector<1x8x8xf32>
    %43 = math.exp %42 : vector<1x8x8xf32>
    %cst_51 = arith.constant dense<0.000000e+00> : vector<1x8xf32>
    %44 = vector.multi_reduction <add>, %43, %cst_51 [2] : vector<1x8x8xf32> to vector<1x8xf32>
    %45 = vector.shape_cast %44 : vector<1x8xf32> to vector<1x8x1xf32>
    %46 = tpu.reciprocal %45 : vector<1x8x1xf32> -> vector<1x8x1xf32>
    %47 = vector.broadcast %46 : vector<1x8x1xf32> to vector<1x8x8xf32>
    %48 = arith.mulf %43, %47 : vector<1x8x8xf32>
    "tpu.trace_start"() <{level = 10 : i32, message = "bqk,bkd->bqd"}> : () -> ()
    %cst_52 = arith.constant dense<0.000000e+00> : vector<1x8x8xf32>
    %49 = tpu.matmul %48, %37, %cst_52 {dimension_numbers = #tpu.dot_dimension_numbers<[2], [1], [1], [2], [0, 0, 0, 1, 1, 2], [0], [0]>} : vector<1x8x8xf32>, vector<1x8x8xf32>, vector<1x8x8xf32> -> vector<1x8x8xf32>
    "tpu.trace_stop"() : () -> ()
    %c0_53 = arith.constant 0 : index
    %c0_54 = arith.constant 0 : index
    %50 = vector.load %arg10[%c0_53, %c0_54] : memref<32x32xf32, #tpu.memory_space<vmem>>, vector<8x32xf32>
    %51 = vector.shape_cast %49 : vector<1x8x8xf32> to vector<8x8xf32>
    %cst_55 = arith.constant dense<0.000000e+00> : vector<8x32xf32>
    %52 = tpu.matmul %51, %50, %cst_55 {dimension_numbers = #tpu.dot_dimension_numbers<[1], [0], [0], [1], [0, 0, 1, 1], [], []>} : vector<8x8xf32>, vector<8x32xf32>, vector<8x32xf32> -> vector<8x32xf32>
    %c0_56 = arith.constant 0 : index
    %c0_57 = arith.constant 0 : index
    %c0_58 = arith.constant 0 : index
    %53 = vector.load %arg18[%c0_56, %c0_57, %c0_58] : memref<1x8x32xf32, #tpu.memory_space<vmem>>, vector<1x8x32xf32>
    %54 = vector.shape_cast %52 : vector<8x32xf32> to vector<1x8x32xf32>
    %55 = arith.addf %53, %54 : vector<1x8x32xf32>
    %c0_59 = arith.constant 0 : index
    %c0_60 = arith.constant 0 : index
    %c0_61 = arith.constant 0 : index
    %56 = vector.load %arg18[%c0_59, %c0_60, %c0_61] : memref<1x8x32xf32, #tpu.memory_space<vmem>>, vector<1x8x32xf32>
    tpu.vector_store %arg18[%c0_59, %c0_60, %c0_61], %55 {strides = array<i32>} : memref<1x8x32xf32, #tpu.memory_space<vmem>>, vector<1x8x32xf32>,
    %c0_62 = arith.constant 0 : index
    %c0_63 = arith.constant 0 : index
    %c8 = arith.constant 8 : index
    %57 = vector.load %arg15[%c0_62, %c0_63, %c8] : memref<1x8x32xf32, #tpu.memory_space<vmem>>, vector<1x8x8xf32>
    %c0_64 = arith.constant 0 : index
    %c0_65 = arith.constant 0 : index
    %c8_66 = arith.constant 8 : index
    %58 = vector.load %arg16[%c0_64, %c0_65, %c8_66] : memref<1x8x32xf32, #tpu.memory_space<vmem>>, vector<1x8x8xf32>
    %c0_67 = arith.constant 0 : index
    %c0_68 = arith.constant 0 : index
    %c8_69 = arith.constant 8 : index
    %59 = vector.load %arg17[%c0_67, %c0_68, %c8_69] : memref<1x8x32xf32, #tpu.memory_space<vmem>>, vector<1x8x8xf32>
    "tpu.trace_start"() <{level = 10 : i32, message = "bqd,bkd->bqk"}> : () -> ()
    %cst_70 = arith.constant dense<0.000000e+00> : vector<1x8x8xf32>
    %60 = tpu.matmul %57, %58, %cst_70 {dimension_numbers = #tpu.dot_dimension_numbers<[2], [2], [1], [1], [0, 0, 0, 1, 1, 1], [0], [0]>} : vector<1x8x8xf32>, vector<1x8x8xf32>, vector<1x8x8xf32> -> vector<1x8x8xf32>
    "tpu.trace_stop"() : () -> ()
    %cst_71 = arith.constant dense<0xFF800000> : vector<1x8xf32>
    %61 = vector.multi_reduction <maximumf>, %60, %cst_71 [2] : vector<1x8x8xf32> to vector<1x8xf32>
    %62 = vector.shape_cast %61 : vector<1x8xf32> to vector<1x8x1xf32>
    %63 = vector.broadcast %62 : vector<1x8x1xf32> to vector<1x8x8xf32>
    %64 = arith.subf %60, %63 : vector<1x8x8xf32>
    %65 = math.exp %64 : vector<1x8x8xf32>
    %cst_72 = arith.constant dense<0.000000e+00> : vector<1x8xf32>
    %66 = vector.multi_reduction <add>, %65, %cst_72 [2] : vector<1x8x8xf32> to vector<1x8xf32>
    %67 = vector.shape_cast %66 : vector<1x8xf32> to vector<1x8x1xf32>
    %68 = tpu.reciprocal %67 : vector<1x8x1xf32> -> vector<1x8x1xf32>
    %69 = vector.broadcast %68 : vector<1x8x1xf32> to vector<1x8x8xf32>
    %70 = arith.mulf %65, %69 : vector<1x8x8xf32>
    "tpu.trace_start"() <{level = 10 : i32, message = "bqk,bkd->bqd"}> : () -> ()
    %cst_73 = arith.constant dense<0.000000e+00> : vector<1x8x8xf32>
    %71 = tpu.matmul %70, %59, %cst_73 {dimension_numbers = #tpu.dot_dimension_numbers<[2], [1], [1], [2], [0, 0, 0, 1, 1, 2], [0], [0]>} : vector<1x8x8xf32>, vector<1x8x8xf32>, vector<1x8x8xf32> -> vector<1x8x8xf32>
    "tpu.trace_stop"() : () -> ()
    %c8_74 = arith.constant 8 : index
    %c0_75 = arith.constant 0 : index
    %72 = vector.load %arg10[%c8_74, %c0_75] : memref<32x32xf32, #tpu.memory_space<vmem>>, vector<8x32xf32>
    %73 = vector.shape_cast %71 : vector<1x8x8xf32> to vector<8x8xf32>
    %cst_76 = arith.constant dense<0.000000e+00> : vector<8x32xf32>
    %74 = tpu.matmul %73, %72, %cst_76 {dimension_numbers = #tpu.dot_dimension_numbers<[1], [0], [0], [1], [0, 0, 1, 1], [], []>} : vector<8x8xf32>, vector<8x32xf32>, vector<8x32xf32> -> vector<8x32xf32>
    %c0_77 = arith.constant 0 : index
    %c0_78 = arith.constant 0 : index
    %c0_79 = arith.constant 0 : index
    %75 = vector.load %arg18[%c0_77, %c0_78, %c0_79] : memref<1x8x32xf32, #tpu.memory_space<vmem>>, vector<1x8x32xf32>
    %76 = vector.shape_cast %74 : vector<8x32xf32> to vector<1x8x32xf32>
    %77 = arith.addf %75, %76 : vector<1x8x32xf32>
    %c0_80 = arith.constant 0 : index
    %c0_81 = arith.constant 0 : index
    %c0_82 = arith.constant 0 : index
    %78 = vector.load %arg18[%c0_80, %c0_81, %c0_82] : memref<1x8x32xf32, #tpu.memory_space<vmem>>, vector<1x8x32xf32>
    tpu.vector_store %arg18[%c0_80, %c0_81, %c0_82], %77 {strides = array<i32>} : memref<1x8x32xf32, #tpu.memory_space<vmem>>, vector<1x8x32xf32>,
    %c0_83 = arith.constant 0 : index
    %c0_84 = arith.constant 0 : index
    %c16 = arith.constant 16 : index
    %79 = vector.load %arg15[%c0_83, %c0_84, %c16] : memref<1x8x32xf32, #tpu.memory_space<vmem>>, vector<1x8x8xf32>
    %c0_85 = arith.constant 0 : index
    %c0_86 = arith.constant 0 : index
    %c16_87 = arith.constant 16 : index
    %80 = vector.load %arg16[%c0_85, %c0_86, %c16_87] : memref<1x8x32xf32, #tpu.memory_space<vmem>>, vector<1x8x8xf32>
    %c0_88 = arith.constant 0 : index
    %c0_89 = arith.constant 0 : index
    %c16_90 = arith.constant 16 : index
    %81 = vector.load %arg17[%c0_88, %c0_89, %c16_90] : memref<1x8x32xf32, #tpu.memory_space<vmem>>, vector<1x8x8xf32>
    "tpu.trace_start"() <{level = 10 : i32, message = "bqd,bkd->bqk"}> : () -> ()
    %cst_91 = arith.constant dense<0.000000e+00> : vector<1x8x8xf32>
    %82 = tpu.matmul %79, %80, %cst_91 {dimension_numbers = #tpu.dot_dimension_numbers<[2], [2], [1], [1], [0, 0, 0, 1, 1, 1], [0], [0]>} : vector<1x8x8xf32>, vector<1x8x8xf32>, vector<1x8x8xf32> -> vector<1x8x8xf32>
    "tpu.trace_stop"() : () -> ()
    %cst_92 = arith.constant dense<0xFF800000> : vector<1x8xf32>
    %83 = vector.multi_reduction <maximumf>, %82, %cst_92 [2] : vector<1x8x8xf32> to vector<1x8xf32>
    %84 = vector.shape_cast %83 : vector<1x8xf32> to vector<1x8x1xf32>
    %85 = vector.broadcast %84 : vector<1x8x1xf32> to vector<1x8x8xf32>
    %86 = arith.subf %82, %85 : vector<1x8x8xf32>
    %87 = math.exp %86 : vector<1x8x8xf32>
    %cst_93 = arith.constant dense<0.000000e+00> : vector<1x8xf32>
    %88 = vector.multi_reduction <add>, %87, %cst_93 [2] : vector<1x8x8xf32> to vector<1x8xf32>
    %89 = vector.shape_cast %88 : vector<1x8xf32> to vector<1x8x1xf32>
    %90 = tpu.reciprocal %89 : vector<1x8x1xf32> -> vector<1x8x1xf32>
    %91 = vector.broadcast %90 : vector<1x8x1xf32> to vector<1x8x8xf32>
    %92 = arith.mulf %87, %91 : vector<1x8x8xf32>
    "tpu.trace_start"() <{level = 10 : i32, message = "bqk,bkd->bqd"}> : () -> ()
    %cst_94 = arith.constant dense<0.000000e+00> : vector<1x8x8xf32>
    %93 = tpu.matmul %92, %81, %cst_94 {dimension_numbers = #tpu.dot_dimension_numbers<[2], [1], [1], [2], [0, 0, 0, 1, 1, 2], [0], [0]>} : vector<1x8x8xf32>, vector<1x8x8xf32>, vector<1x8x8xf32> -> vector<1x8x8xf32>
    "tpu.trace_stop"() : () -> ()
    %c16_95 = arith.constant 16 : index
    %c0_96 = arith.constant 0 : index
    %94 = vector.load %arg10[%c16_95, %c0_96] : memref<32x32xf32, #tpu.memory_space<vmem>>, vector<8x32xf32>
    %95 = vector.shape_cast %93 : vector<1x8x8xf32> to vector<8x8xf32>
    %cst_97 = arith.constant dense<0.000000e+00> : vector<8x32xf32>
    %96 = tpu.matmul %95, %94, %cst_97 {dimension_numbers = #tpu.dot_dimension_numbers<[1], [0], [0], [1], [0, 0, 1, 1], [], []>} : vector<8x8xf32>, vector<8x32xf32>, vector<8x32xf32> -> vector<8x32xf32>
    %c0_98 = arith.constant 0 : index
    %c0_99 = arith.constant 0 : index
    %c0_100 = arith.constant 0 : index
    %97 = vector.load %arg18[%c0_98, %c0_99, %c0_100] : memref<1x8x32xf32, #tpu.memory_space<vmem>>, vector<1x8x32xf32>
    %98 = vector.shape_cast %96 : vector<8x32xf32> to vector<1x8x32xf32>
    %99 = arith.addf %97, %98 : vector<1x8x32xf32>
    %c0_101 = arith.constant 0 : index
    %c0_102 = arith.constant 0 : index
    %c0_103 = arith.constant 0 : index
    %100 = vector.load %arg18[%c0_101, %c0_102, %c0_103] : memref<1x8x32xf32, #tpu.memory_space<vmem>>, vector<1x8x32xf32>
    tpu.vector_store %arg18[%c0_101, %c0_102, %c0_103], %99 {strides = array<i32>} : memref<1x8x32xf32, #tpu.memory_space<vmem>>, vector<1x8x32xf32>,
    %c0_104 = arith.constant 0 : index
    %c0_105 = arith.constant 0 : index
    %c24 = arith.constant 24 : index
    %101 = vector.load %arg15[%c0_104, %c0_105, %c24] : memref<1x8x32xf32, #tpu.memory_space<vmem>>, vector<1x8x8xf32>
    %c0_106 = arith.constant 0 : index
    %c0_107 = arith.constant 0 : index
    %c24_108 = arith.constant 24 : index
    %102 = vector.load %arg16[%c0_106, %c0_107, %c24_108] : memref<1x8x32xf32, #tpu.memory_space<vmem>>, vector<1x8x8xf32>
    %c0_109 = arith.constant 0 : index
    %c0_110 = arith.constant 0 : index
    %c24_111 = arith.constant 24 : index
    %103 = vector.load %arg17[%c0_109, %c0_110, %c24_111] : memref<1x8x32xf32, #tpu.memory_space<vmem>>, vector<1x8x8xf32>
    "tpu.trace_start"() <{level = 10 : i32, message = "bqd,bkd->bqk"}> : () -> ()
    %cst_112 = arith.constant dense<0.000000e+00> : vector<1x8x8xf32>
    %104 = tpu.matmul %101, %102, %cst_112 {dimension_numbers = #tpu.dot_dimension_numbers<[2], [2], [1], [1], [0, 0, 0, 1, 1, 1], [0], [0]>} : vector<1x8x8xf32>, vector<1x8x8xf32>, vector<1x8x8xf32> -> vector<1x8x8xf32>
    "tpu.trace_stop"() : () -> ()
    %cst_113 = arith.constant dense<0xFF800000> : vector<1x8xf32>
    %105 = vector.multi_reduction <maximumf>, %104, %cst_113 [2] : vector<1x8x8xf32> to vector<1x8xf32>
    %106 = vector.shape_cast %105 : vector<1x8xf32> to vector<1x8x1xf32>
    %107 = vector.broadcast %106 : vector<1x8x1xf32> to vector<1x8x8xf32>
    %108 = arith.subf %104, %107 : vector<1x8x8xf32>
    %109 = math.exp %108 : vector<1x8x8xf32>
    %cst_114 = arith.constant dense<0.000000e+00> : vector<1x8xf32>
    %110 = vector.multi_reduction <add>, %109, %cst_114 [2] : vector<1x8x8xf32> to vector<1x8xf32>
    %111 = vector.shape_cast %110 : vector<1x8xf32> to vector<1x8x1xf32>
    %112 = tpu.reciprocal %111 : vector<1x8x1xf32> -> vector<1x8x1xf32>
    %113 = vector.broadcast %112 : vector<1x8x1xf32> to vector<1x8x8xf32>
    %114 = arith.mulf %109, %113 : vector<1x8x8xf32>
    "tpu.trace_start"() <{level = 10 : i32, message = "bqk,bkd->bqd"}> : () -> ()
    %cst_115 = arith.constant dense<0.000000e+00> : vector<1x8x8xf32>
    %115 = tpu.matmul %114, %103, %cst_115 {dimension_numbers = #tpu.dot_dimension_numbers<[2], [1], [1], [2], [0, 0, 0, 1, 1, 2], [0], [0]>} : vector<1x8x8xf32>, vector<1x8x8xf32>, vector<1x8x8xf32> -> vector<1x8x8xf32>
    "tpu.trace_stop"() : () -> ()
    %c24_116 = arith.constant 24 : index
    %c0_117 = arith.constant 0 : index
    %116 = vector.load %arg10[%c24_116, %c0_117] : memref<32x32xf32, #tpu.memory_space<vmem>>, vector<8x32xf32>
    %117 = vector.shape_cast %115 : vector<1x8x8xf32> to vector<8x8xf32>
    %cst_118 = arith.constant dense<0.000000e+00> : vector<8x32xf32>
    %118 = tpu.matmul %117, %116, %cst_118 {dimension_numbers = #tpu.dot_dimension_numbers<[1], [0], [0], [1], [0, 0, 1, 1], [], []>} : vector<8x8xf32>, vector<8x32xf32>, vector<8x32xf32> -> vector<8x32xf32>
    %c0_119 = arith.constant 0 : index
    %c0_120 = arith.constant 0 : index
    %c0_121 = arith.constant 0 : index
    %119 = vector.load %arg18[%c0_119, %c0_120, %c0_121] : memref<1x8x32xf32, #tpu.memory_space<vmem>>, vector<1x8x32xf32>
    %120 = vector.shape_cast %118 : vector<8x32xf32> to vector<1x8x32xf32>
    %121 = arith.addf %119, %120 : vector<1x8x32xf32>
    %c0_122 = arith.constant 0 : index
    %c0_123 = arith.constant 0 : index
    %c0_124 = arith.constant 0 : index
    %122 = vector.load %arg18[%c0_122, %c0_123, %c0_124] : memref<1x8x32xf32, #tpu.memory_space<vmem>>, vector<1x8x32xf32>
    tpu.vector_store %arg18[%c0_122, %c0_123, %c0_124], %121 {strides = array<i32>} : memref<1x8x32xf32, #tpu.memory_space<vmem>>, vector<1x8x32xf32>,
    %c0_125 = arith.constant 0 : index
    %c0_126 = arith.constant 0 : index
    %c0_127 = arith.constant 0 : index
    %123 = vector.load %arg18[%c0_125, %c0_126, %c0_127] : memref<1x8x32xf32, #tpu.memory_space<vmem>>, vector<1x8x32xf32>
    %cst_128 = arith.constant dense<0.000000e+00> : vector<1x8xf32>
    %124 = vector.multi_reduction <add>, %123, %cst_128 [2] : vector<1x8x32xf32> to vector<1x8xf32>
    %125 = vector.shape_cast %124 : vector<1x8xf32> to vector<1x8x1xf32>
    %cst_129 = arith.constant 3.200000e+01 : f32
    %126 = vector.broadcast %cst_129 : f32 to vector<1x8x1xf32>
    %127 = arith.divf %125, %126 : vector<1x8x1xf32>
    %128 = vector.broadcast %127 : vector<1x8x1xf32> to vector<1x8x32xf32>
    %129 = arith.subf %123, %128 : vector<1x8x32xf32>
    %130 = arith.mulf %129, %129 : vector<1x8x32xf32>
    %cst_130 = arith.constant dense<0.000000e+00> : vector<1x8xf32>
    %131 = vector.multi_reduction <add>, %130, %cst_130 [2] : vector<1x8x32xf32> to vector<1x8xf32>
    %132 = vector.shape_cast %131 : vector<1x8xf32> to vector<1x8x1xf32>
    %cst_131 = arith.constant 3.200000e+01 : f32
    %133 = vector.broadcast %cst_131 : f32 to vector<1x8x1xf32>
    %134 = arith.divf %132, %133 : vector<1x8x1xf32>
    %cst_132 = arith.constant 9.99999974E-6 : f32
    %135 = vector.broadcast %cst_132 : f32 to vector<1x8x1xf32>
    %136 = arith.addf %134, %135 : vector<1x8x1xf32>
    %137 = math.rsqrt %136 : vector<1x8x1xf32>
    %138 = vector.broadcast %137 : vector<1x8x1xf32> to vector<1x8x32xf32>
    %139 = arith.mulf %129, %138 : vector<1x8x32xf32>
    %c0_133 = arith.constant 0 : index
    %c0_134 = arith.constant 0 : index
    %140 = vector.load %arg12[%c0_133, %c0_134] : memref<1x32xf32, #tpu.memory_space<vmem>>, vector<1x32xf32>
    %141 = vector.shape_cast %140 : vector<1x32xf32> to vector<1x1x32xf32>
    %142 = vector.broadcast %141 : vector<1x1x32xf32> to vector<1x8x32xf32>
    %143 = arith.mulf %139, %142 : vector<1x8x32xf32>
    %c0_135 = arith.constant 0 : index
    %c0_136 = arith.constant 0 : index
    %144 = vector.load %arg13[%c0_135, %c0_136] : memref<1x32xf32, #tpu.memory_space<vmem>>, vector<1x32xf32>
    %145 = vector.shape_cast %144 : vector<1x32xf32> to vector<1x1x32xf32>
    %146 = vector.broadcast %145 : vector<1x1x32xf32> to vector<1x8x32xf32>
    %147 = arith.addf %143, %146 : vector<1x8x32xf32>
    %c0_137 = arith.constant 0 : index
    %c0_138 = arith.constant 0 : index
    %c0_139 = arith.constant 0 : index
    %148 = vector.load %arg14[%c0_137, %c0_138, %c0_139] : memref<1x8x32xf32, #tpu.memory_space<vmem>>, vector<1x8x32xf32>
    tpu.vector_store %arg14[%c0_137, %c0_138, %c0_139], %147 {strides = array<i32>} : memref<1x8x32xf32, #tpu.memory_space<vmem>>, vector<1x8x32xf32>,
    return
  }
  func.func @transform_0(%arg0: i32) -> (i32, i32, i32) {
    %c0_i32 = arith.constant 0 : i32
    %c0_i32_0 = arith.constant 0 : i32
    %c0_i32_1 = arith.constant 0 : i32
    return %arg0, %c0_i32, %c0_i32_0 : i32, i32, i32
  }
  func.func @transform_1(%arg0: i32) -> (i32, i32, i32) {
    %c0_i32 = arith.constant 0 : i32
    %c0_i32_0 = arith.constant 0 : i32
    %c0_i32_1 = arith.constant 0 : i32
    return %arg0, %c0_i32, %c0_i32_0 : i32, i32, i32
  }
  func.func @transform_2(%arg0: i32) -> (i32, i32, i32) {
    %c0_i32 = arith.constant 0 : i32
    %c0_i32_0 = arith.constant 0 : i32
    %c0_i32_1 = arith.constant 0 : i32
    return %arg0, %c0_i32, %c0_i32_0 : i32, i32, i32
  }
  func.func @transform_3(%arg0: i32) -> (i32, i32) {
    %c0_i32 = arith.constant 0 : i32
    %c0_i32_0 = arith.constant 0 : i32
    %c0_i32_1 = arith.constant 0 : i32
    return %c0_i32, %c0_i32_0 : i32, i32
  }
  func.func @transform_4(%arg0: i32) -> (i32, i32) {
    %c0_i32 = arith.constant 0 : i32
    %c0_i32_0 = arith.constant 0 : i32
    %c0_i32_1 = arith.constant 0 : i32
    return %c0_i32, %c0_i32_0 : i32, i32
  }
  func.func @transform_5(%arg0: i32) -> (i32, i32) {
    %c0_i32 = arith.constant 0 : i32
    %c0_i32_0 = arith.constant 0 : i32
    %c0_i32_1 = arith.constant 0 : i32
    return %c0_i32, %c0_i32_0 : i32, i32
  }
  func.func @transform_6(%arg0: i32) -> (i32, i32) {
    %c0_i32 = arith.constant 0 : i32
    %c0_i32_0 = arith.constant 0 : i32
    %c0_i32_1 = arith.constant 0 : i32
    return %c0_i32, %c0_i32_0 : i32, i32
  }
  func.func @transform_7(%arg0: i32) -> (i32, i32) {
    %c0_i32 = arith.constant 0 : i32
    %c0_i32_0 = arith.constant 0 : i32
    %c0_i32_1 = arith.constant 0 : i32
    return %c0_i32, %c0_i32_0 : i32, i32
  }
  func.func @transform_8(%arg0: i32) -> (i32, i32) {
    %c0_i32 = arith.constant 0 : i32
    %c0_i32_0 = arith.constant 0 : i32
    %c0_i32_1 = arith.constant 0 : i32
    return %c0_i32, %c0_i32_0 : i32, i32
  }
  func.func @transform_9(%arg0: i32) -> (i32, i32) {
    %c0_i32 = arith.constant 0 : i32
    %c0_i32_0 = arith.constant 0 : i32
    %c0_i32_1 = arith.constant 0 : i32
    return %c0_i32, %c0_i32_0 : i32, i32
  }
  func.func @transform_10(%arg0: i32) -> (i32, i32) {
    %c0_i32 = arith.constant 0 : i32
    %c0_i32_0 = arith.constant 0 : i32
    %c0_i32_1 = arith.constant 0 : i32
    return %c0_i32, %c0_i32_0 : i32, i32
  }
  func.func @transform_11(%arg0: i32) -> (i32, i32) {
    %c0_i32 = arith.constant 0 : i32
    %c0_i32_0 = arith.constant 0 : i32
    %c0_i32_1 = arith.constant 0 : i32
    return %c0_i32, %c0_i32_0 : i32, i32
  }
  func.func @transform_12(%arg0: i32) -> (i32, i32) {
    %c0_i32 = arith.constant 0 : i32
    %c0_i32_0 = arith.constant 0 : i32
    %c0_i32_1 = arith.constant 0 : i32
    return %c0_i32, %c0_i32_0 : i32, i32
  }
  func.func @transform_13(%arg0: i32) -> (i32, i32, i32) {
    %c0_i32 = arith.constant 0 : i32
    %c0_i32_0 = arith.constant 0 : i32
    %c0_i32_1 = arith.constant 0 : i32
    return %arg0, %c0_i32, %c0_i32_0 : i32, i32, i32
  }
}

</mosaic_0001>

<llo_original>
// kernel: tpu_custom_call.1
$region0: #{tpu_custom_call.1}
  #allocation0 [shape = 'u32[]', space=smem, size = 0x4, offset = 0x4, fixed_abs, tag = 'smem constant byte address 0x4 - core index']
  #allocation1 [shape = 'u32[72,128]{1,0:T(1,128)}', space=vmem, size = 0x9000, scoped, tag = 'internal scratch']
  #allocation2 [shape = 'f32[1,8,32]{2,1,0:T(8,128)}', space=vmem, size = 0x1000, scoped, tag = 'scratch operand']
  #allocation3 [shape = 'f32[1,8,32]{2,1,0:T(8,128)}', space=vmem, size = 0x1000, scoped, tag = 'scratch operand']
  #allocation4 [shape = 'f32[1,8,32]{2,1,0:T(8,128)}', space=vmem, size = 0x1000, scoped, tag = 'scratch operand']
  #allocation5 [shape = 'f32[1,8,32]{2,1,0:T(8,128)}', space=vmem, size = 0x1000, scoped, tag = 'scratch operand']
  %s0 = inlined_call_operand.hbm [shape: f32[2,8,32], index: 0, kind: input, shape index: {}]
  %s1 = inlined_call_operand.hbm [shape: f32[2,8,32], index: 1, kind: input, shape index: {}]
  %s2 = inlined_call_operand.hbm [shape: f32[2,8,32], index: 2, kind: input, shape index: {}]
  %s3 = inlined_call_operand.hbm [shape: f32[32,32], index: 3, kind: input, shape index: {}]
  %s4 = inlined_call_operand.hbm [shape: f32[32,32], index: 4, kind: input, shape index: {}]
  %s5 = inlined_call_operand.hbm [shape: f32[32,32], index: 5, kind: input, shape index: {}]
  %s6 = inlined_call_operand.vmem [shape: f32[1,32], index: 6, kind: input, shape index: {}]
  %s7 = inlined_call_operand.vmem [shape: f32[1,32], index: 7, kind: input, shape index: {}]
  %s8 = inlined_call_operand.vmem [shape: f32[1,32], index: 8, kind: input, shape index: {}]
  %s9 = inlined_call_operand.hbm [shape: f32[32,32], index: 9, kind: input, shape index: {}]
  %s10 = inlined_call_operand.vmem [shape: f32[1,32], index: 10, kind: input, shape index: {}]
  %s11 = inlined_call_operand.vmem [shape: f32[1,32], index: 11, kind: input, shape index: {}]
  %s12 = inlined_call_operand.vmem [shape: f32[1,32], index: 12, kind: input, shape index: {}]
  %s13 = inlined_call_operand.hbm [shape: f32[2,8,32], index: 13, kind: output, shape index: {}]
  %s14 = sld [smem:[#allocation0]]
  $region113: #{tpu_custom_call.1} parent=0
    _
  %s16 = ssub.s32 1, %s14
  %s17 = scalar_select 0, %s16, %s14
  $region1: #{tpu_custom_call.1} parent=0
    #allocation6 [shape = 'u8[8192]{0}', space=vmem, size = 0x2000, scoped, tag = 'input window, operand 0']
    #allocation7 [shape = 's32[2]{0}', space=sflag, size = 0x8, scoped, tag = 'scoped memory for tpu_custom_call.1']
    #allocation8 [shape = 's32[2]{0}', space=sflag, size = 0x8, scoped, tag = 'scoped memory for tpu_custom_call.1']
    #allocation9 [shape = 'u8[8192]{0}', space=vmem, size = 0x2000, scoped, tag = 'input window, operand 1']
    #allocation10 [shape = 's32[2]{0}', space=sflag, size = 0x8, scoped, tag = 'scoped memory for tpu_custom_call.1']
    #allocation11 [shape = 'u8[8192]{0}', space=vmem, size = 0x2000, scoped, tag = 'input window, operand 2']
    #allocation12 [shape = 'u8[16384]{0}', space=vmem, size = 0x4000, scoped, tag = 'input window, operand 3, single buffered']
    #allocation13 [shape = 's32[1]{0}', space=sflag, size = 0x4, scoped, tag = 'scoped memory for tpu_custom_call.1']
    #allocation14 [shape = 'u8[16384]{0}', space=vmem, size = 0x4000, scoped, tag = 'input window, operand 4, single buffered']
    #allocation15 [shape = 'u8[16384]{0}', space=vmem, size = 0x4000, scoped, tag = 'input window, operand 5, single buffered']
    #allocation16 [shape = 's32[1]{0}', space=sflag, size = 0x4, scoped, tag = 'scoped memory for tpu_custom_call.1']
    #allocation17 [shape = 'u8[16384]{0}', space=vmem, size = 0x4000, scoped, tag = 'input window, operand 9, single buffered']
    #allocation18 [shape = 'u8[8192]{0}', space=vmem, size = 0x2000, scoped, tag = 'output window, operand 0']
    %18 = vsyncpa [#allocation7], 0
    %s19 = scalar_lea.sflag [#allocation7], 1
    %20 = vsyncpa %s19, 0
    %21 = vsyncpa [#allocation10], 0
    %s22 = scalar_lea.sflag [#allocation10], 1
    %23 = vsyncpa %s22, 0
    %24 = vsyncpa [#allocation13], 0
    %25 = vsyncpa [#allocation16], 0
    %26 = vsyncpa [#allocation8], 0
    %s27 = scalar_lea.sflag [#allocation8], 1
    %28 = vsyncpa %s27, 0
    loop: start=0, step=1, limit=4
    $region2: #{tpu_custom_call.1} parent=1 // loop_pre_header
      _
    $region3: #{tpu_custom_call.1} parent=1 // loop_header
      %s30 = sphi 0, %s34
      %p31 = scmp.ge.s32.totalorder %s30, 4
      %s40 = sphi 0, %s42
      %s43 = sphi 0, %s40
      %s44 = sphi 0, %s43
      %s60 = sphi 0, %s44
      %s66 = sphi 0, %s68
      %s69 = sphi 0, %s66
      %s70 = sphi 0, %s69
      %s86 = sphi 0, %s70
      %s92 = sphi 0, %s94
      %s95 = sphi 0, %s92
      %s96 = sphi 0, %s95
      %s112 = sphi 0, %s96
      %s116 = sphi 0, %s116
      %s118 = sphi 0, %s116
      %s119 = sphi 0, %s118
      %s133 = sphi 0, %s119
      %s137 = sphi 0, %s137
      %s139 = sphi 0, %s137
      %s140 = sphi 0, %s139
      %s154 = sphi 0, %s140
      %s158 = sphi 0, %s158
      %s160 = sphi 0, %s158
      %s161 = sphi 0, %s160
      %s175 = sphi 0, %s161
      %s179 = sphi 0, %s179
      %s181 = sphi 0, %s179
      %s182 = sphi 0, %s181
      %s196 = sphi 0, %s182
      %s200 = sphi 0, %s200
      %s202 = sphi 0, %s200
      %s203 = sphi 0, %s202
      %s217 = sphi 0, %s203
      %s221 = sphi 0, %s221
      %s223 = sphi 0, %s221
      %s224 = sphi 0, %s223
      %s238 = sphi 0, %s224
      %s242 = sphi 0, %s242
      %s244 = sphi 0, %s242
      %s245 = sphi 0, %s244
      %s259 = sphi 0, %s245
      %s263 = sphi 0, %s263
      %s265 = sphi 0, %s263
      %s266 = sphi 0, %s265
      %s280 = sphi 0, %s266
      %s284 = sphi 0, %s284
      %s286 = sphi 0, %s284
      %s287 = sphi 0, %s286
      %s301 = sphi 0, %s287
      %s305 = sphi 0, %s305
      %s307 = sphi 0, %s305
      %s308 = sphi 0, %s307
      %s322 = sphi 0, %s308
      %s328 = sphi 0, %s330
      %s331 = sphi 0, %s328
      %s332 = sphi 0, %s331
      %s348 = sphi 0, %s332
    $region4: #{tpu_custom_call.1} parent=1 // loop_header_branch
      %33 = sbr.rel (%p31) target = $region8
    $region5: #{tpu_custom_call.1} parent=1 // loop_body
      %s35 = ssub.s32 %s30, 1
      %s36 = ssub.s32 %s30, 2
      %s37 = sadd.s32 %s30, 1
      %s38 = ssub.s32 %s30, %s37
      %p39 = scmp.eq.s32.totalorder %s38, 0
      %s41 = sadd.s32 %s40, 1
      %s42 = scalar_select %p39, %s40, %s41
      %p45 = pneg %p39
      %p46 = scmp.eq.s32.totalorder %s30, 1
      %p47 = por %p45, %p46
      %p48 = scmp.ne.s32.totalorder %s40, %s43
      %p49 = scmp.eq.s32.totalorder %s30, 0
      %p50 = por %p48, %p49
      %p51 = scmp.ne.s32.totalorder %s40, %s43
      %p52 = scmp.eq.s32.totalorder %s35, 1
      %p53 = por %p51, %p52
      %p54 = scmp.ne.s32.totalorder %s43, %s44
      %p55 = scmp.eq.s32.totalorder %s35, 0
      %p56 = por %p54, %p55
      %p57 = scmp.ne.s32.totalorder %s43, %s44
      %p58 = scmp.eq.s32.totalorder %s36, 1
      %p59 = por %p57, %p58
      %p61 = scmp.ne.s32.totalorder %s44, %s60
      %p62 = scmp.eq.s32.totalorder %s36, 0
      %p63 = por %p61, %p62
      %s64 = ssub.s32 %s30, %s37
      %p65 = scmp.eq.s32.totalorder %s64, 0
      %s67 = sadd.s32 %s66, 1
      %s68 = scalar_select %p65, %s66, %s67
      %p71 = pneg %p65
      %p72 = scmp.eq.s32.totalorder %s30, 1
      %p73 = por %p71, %p72
      %p74 = scmp.ne.s32.totalorder %s66, %s69
      %p75 = scmp.eq.s32.totalorder %s30, 0
      %p76 = por %p74, %p75
      %p77 = scmp.ne.s32.totalorder %s66, %s69
      %p78 = scmp.eq.s32.totalorder %s35, 1
      %p79 = por %p77, %p78
      %p80 = scmp.ne.s32.totalorder %s69, %s70
      %p81 = scmp.eq.s32.totalorder %s35, 0
      %p82 = por %p80, %p81
      %p83 = scmp.ne.s32.totalorder %s69, %s70
      %p84 = scmp.eq.s32.totalorder %s36, 1
      %p85 = por %p83, %p84
      %p87 = scmp.ne.s32.totalorder %s70, %s86
      %p88 = scmp.eq.s32.totalorder %s36, 0
      %p89 = por %p87, %p88
      %s90 = ssub.s32 %s30, %s37
      %p91 = scmp.eq.s32.totalorder %s90, 0
      %s93 = sadd.s32 %s92, 1
      %s94 = scalar_select %p91, %s92, %s93
      %p97 = pneg %p91
      %p98 = scmp.eq.s32.totalorder %s30, 1
      %p99 = por %p97, %p98
      %p100 = scmp.ne.s32.totalorder %s92, %s95
      %p101 = scmp.eq.s32.totalorder %s30, 0
      %p102 = por %p100, %p101
      %p103 = scmp.ne.s32.totalorder %s92, %s95
      %p104 = scmp.eq.s32.totalorder %s35, 1
      %p105 = por %p103, %p104
      %p106 = scmp.ne.s32.totalorder %s95, %s96
      %p107 = scmp.eq.s32.totalorder %s35, 0
      %p108 = por %p106, %p107
      %p109 = scmp.ne.s32.totalorder %s95, %s96
      %p110 = scmp.eq.s32.totalorder %s36, 1
      %p111 = por %p109, %p110
      %p113 = scmp.ne.s32.totalorder %s96, %s112
      %p114 = scmp.eq.s32.totalorder %s36, 0
      %p115 = por %p113, %p114
      %s117 = sadd.s32 %s116, 1
      %p120 = scmp.eq.s32.totalorder %s30, 1
      %p121 = scmp.ne.s32.totalorder %s116, %s118
      %p122 = scmp.eq.s32.totalorder %s30, 0
      %p123 = por %p121, %p122
      %p124 = scmp.ne.s32.totalorder %s116, %s118
      %p125 = scmp.eq.s32.totalorder %s35, 1
      %p126 = por %p124, %p125
      %p127 = scmp.ne.s32.totalorder %s118, %s119
      %p128 = scmp.eq.s32.totalorder %s35, 0
      %p129 = por %p127, %p128
      %p130 = scmp.ne.s32.totalorder %s118, %s119
      %p131 = scmp.eq.s32.totalorder %s36, 1
      %p132 = por %p130, %p131
      %p134 = scmp.ne.s32.totalorder %s119, %s133
      %p135 = scmp.eq.s32.totalorder %s36, 0
      %p136 = por %p134, %p135
      %s138 = sadd.s32 %s137, 1
      %p141 = scmp.eq.s32.totalorder %s30, 1
      %p142 = scmp.ne.s32.totalorder %s137, %s139
      %p143 = scmp.eq.s32.totalorder %s30, 0
      %p144 = por %p142, %p143
      %p145 = scmp.ne.s32.totalorder %s137, %s139
      %p146 = scmp.eq.s32.totalorder %s35, 1
      %p147 = por %p145, %p146
      %p148 = scmp.ne.s32.totalorder %s139, %s140
      %p149 = scmp.eq.s32.totalorder %s35, 0
      %p150 = por %p148, %p149
      %p151 = scmp.ne.s32.totalorder %s139, %s140
      %p152 = scmp.eq.s32.totalorder %s36, 1
      %p153 = por %p151, %p152
      %p155 = scmp.ne.s32.totalorder %s140, %s154
      %p156 = scmp.eq.s32.totalorder %s36, 0
      %p157 = por %p155, %p156
      %s159 = sadd.s32 %s158, 1
      %p162 = scmp.eq.s32.totalorder %s30, 1
      %p163 = scmp.ne.s32.totalorder %s158, %s160
      %p164 = scmp.eq.s32.totalorder %s30, 0
      %p165 = por %p163, %p164
      %p166 = scmp.ne.s32.totalorder %s158, %s160
      %p167 = scmp.eq.s32.totalorder %s35, 1
      %p168 = por %p166, %p167
      %p169 = scmp.ne.s32.totalorder %s160, %s161
      %p170 = scmp.eq.s32.totalorder %s35, 0
      %p171 = por %p169, %p170
      %p172 = scmp.ne.s32.totalorder %s160, %s161
      %p173 = scmp.eq.s32.totalorder %s36, 1
      %p174 = por %p172, %p173
      %p176 = scmp.ne.s32.totalorder %s161, %s175
      %p177 = scmp.eq.s32.totalorder %s36, 0
      %p178 = por %p176, %p177
      %s180 = sadd.s32 %s179, 1
      %p183 = scmp.eq.s32.totalorder %s30, 1
      %p184 = scmp.ne.s32.totalorder %s179, %s181
      %p185 = scmp.eq.s32.totalorder %s30, 0
      %p186 = por %p184, %p185
      %p187 = scmp.ne.s32.totalorder %s179, %s181
      %p188 = scmp.eq.s32.totalorder %s35, 1
      %p189 = por %p187, %p188
      %p190 = scmp.ne.s32.totalorder %s181, %s182
      %p191 = scmp.eq.s32.totalorder %s35, 0
      %p192 = por %p190, %p191
      %p193 = scmp.ne.s32.totalorder %s181, %s182
      %p194 = scmp.eq.s32.totalorder %s36, 1
      %p195 = por %p193, %p194
      %p197 = scmp.ne.s32.totalorder %s182, %s196
      %p198 = scmp.eq.s32.totalorder %s36, 0
      %p199 = por %p197, %p198
      %s201 = sadd.s32 %s200, 1
      %p204 = scmp.eq.s32.totalorder %s30, 1
      %p205 = scmp.ne.s32.totalorder %s200, %s202
      %p206 = scmp.eq.s32.totalorder %s30, 0
      %p207 = por %p205, %p206
      %p208 = scmp.ne.s32.totalorder %s200, %s202
      %p209 = scmp.eq.s32.totalorder %s35, 1
      %p210 = por %p208, %p209
      %p211 = scmp.ne.s32.totalorder %s202, %s203
      %p212 = scmp.eq.s32.totalorder %s35, 0
      %p213 = por %p211, %p212
      %p214 = scmp.ne.s32.totalorder %s202, %s203
      %p215 = scmp.eq.s32.totalorder %s36, 1
      %p216 = por %p214, %p215
      %p218 = scmp.ne.s32.totalorder %s203, %s217
      %p219 = scmp.eq.s32.totalorder %s36, 0
      %p220 = por %p218, %p219
      %s222 = sadd.s32 %s221, 1
      %p225 = scmp.eq.s32.totalorder %s30, 1
      %p226 = scmp.ne.s32.totalorder %s221, %s223
      %p227 = scmp.eq.s32.totalorder %s30, 0
      %p228 = por %p226, %p227
      %p229 = scmp.ne.s32.totalorder %s221, %s223
      %p230 = scmp.eq.s32.totalorder %s35, 1
      %p231 = por %p229, %p230
      %p232 = scmp.ne.s32.totalorder %s223, %s224
      %p233 = scmp.eq.s32.totalorder %s35, 0
      %p234 = por %p232, %p233
      %p235 = scmp.ne.s32.totalorder %s223, %s224
      %p236 = scmp.eq.s32.totalorder %s36, 1
      %p237 = por %p235, %p236
      %p239 = scmp.ne.s32.totalorder %s224, %s238
      %p240 = scmp.eq.s32.totalorder %s36, 0
      %p241 = por %p239, %p240
      %s243 = sadd.s32 %s242, 1
      %p246 = scmp.eq.s32.totalorder %s30, 1
      %p247 = scmp.ne.s32.totalorder %s242, %s244
      %p248 = scmp.eq.s32.totalorder %s30, 0
      %p249 = por %p247, %p248
      %p250 = scmp.ne.s32.totalorder %s242, %s244
      %p251 = scmp.eq.s32.totalorder %s35, 1
      %p252 = por %p250, %p251
      %p253 = scmp.ne.s32.totalorder %s244, %s245
      %p254 = scmp.eq.s32.totalorder %s35, 0
      %p255 = por %p253, %p254
      %p256 = scmp.ne.s32.totalorder %s244, %s245
      %p257 = scmp.eq.s32.totalorder %s36, 1
      %p258 = por %p256, %p257
      %p260 = scmp.ne.s32.totalorder %s245, %s259
      %p261 = scmp.eq.s32.totalorder %s36, 0
      %p262 = por %p260, %p261
      %s264 = sadd.s32 %s263, 1
      %p267 = scmp.eq.s32.totalorder %s30, 1
      %p268 = scmp.ne.s32.totalorder %s263, %s265
      %p269 = scmp.eq.s32.totalorder %s30, 0
      %p270 = por %p268, %p269
      %p271 = scmp.ne.s32.totalorder %s263, %s265
      %p272 = scmp.eq.s32.totalorder %s35, 1
      %p273 = por %p271, %p272
      %p274 = scmp.ne.s32.totalorder %s265, %s266
      %p275 = scmp.eq.s32.totalorder %s35, 0
      %p276 = por %p274, %p275
      %p277 = scmp.ne.s32.totalorder %s265, %s266
      %p278 = scmp.eq.s32.totalorder %s36, 1
      %p279 = por %p277, %p278
      %p281 = scmp.ne.s32.totalorder %s266, %s280
      %p282 = scmp.eq.s32.totalorder %s36, 0
      %p283 = por %p281, %p282
      %s285 = sadd.s32 %s284, 1
      %p288 = scmp.eq.s32.totalorder %s30, 1
      %p289 = scmp.ne.s32.totalorder %s284, %s286
      %p290 = scmp.eq.s32.totalorder %s30, 0
      %p291 = por %p289, %p290
      %p292 = scmp.ne.s32.totalorder %s284, %s286
      %p293 = scmp.eq.s32.totalorder %s35, 1
      %p294 = por %p292, %p293
      %p295 = scmp.ne.s32.totalorder %s286, %s287
      %p296 = scmp.eq.s32.totalorder %s35, 0
      %p297 = por %p295, %p296
      %p298 = scmp.ne.s32.totalorder %s286, %s287
      %p299 = scmp.eq.s32.totalorder %s36, 1
      %p300 = por %p298, %p299
      %p302 = scmp.ne.s32.totalorder %s287, %s301
      %p303 = scmp.eq.s32.totalorder %s36, 0
      %p304 = por %p302, %p303
      %s306 = sadd.s32 %s305, 1
      %p309 = scmp.eq.s32.totalorder %s30, 1
      %p310 = scmp.ne.s32.totalorder %s305, %s307
      %p311 = scmp.eq.s32.totalorder %s30, 0
      %p312 = por %p310, %p311
      %p313 = scmp.ne.s32.totalorder %s305, %s307
      %p314 = scmp.eq.s32.totalorder %s35, 1
      %p315 = por %p313, %p314
      %p316 = scmp.ne.s32.totalorder %s307, %s308
      %p317 = scmp.eq.s32.totalorder %s35, 0
      %p318 = por %p316, %p317
      %p319 = scmp.ne.s32.totalorder %s307, %s308
      %p320 = scmp.eq.s32.totalorder %s36, 1
      %p321 = por %p319, %p320
      %p323 = scmp.ne.s32.totalorder %s308, %s322
      %p324 = scmp.eq.s32.totalorder %s36, 0
      %p325 = por %p323, %p324
      %s326 = ssub.s32 %s30, %s37
      %p327 = scmp.eq.s32.totalorder %s326, 0
      %s329 = sadd.s32 %s328, 1
      %s330 = scalar_select %p327, %s328, %s329
      %p333 = pneg %p327
      %p334 = scmp.eq.s32.totalorder %s30, 1
      %p335 = por %p333, %p334
      %p336 = scmp.ne.s32.totalorder %s328, %s331
      %p337 = scmp.eq.s32.totalorder %s30, 0
      %p338 = por %p336, %p337
      %p339 = scmp.ne.s32.totalorder %s328, %s331
      %p340 = scmp.eq.s32.totalorder %s35, 1
      %p341 = por %p339, %p340
      %p342 = scmp.ne.s32.totalorder %s331, %s332
      %p343 = scmp.eq.s32.totalorder %s35, 0
      %p344 = por %p342, %p343
      %p345 = scmp.ne.s32.totalorder %s331, %s332
      %p346 = scmp.eq.s32.totalorder %s36, 1
      %p347 = por %p345, %p346
      %p349 = scmp.ne.s32.totalorder %s332, %s348
      %p350 = scmp.eq.s32.totalorder %s36, 0
      %p351 = por %p349, %p350
      %p352 = scmp.le.s32.totalorder 1, %s30
      %p353 = scmp.lt.s32.totalorder %s30, 3
      %p354 = pnand %p352, %p353
      %p355 = pneg %p354
      // Predicated region
      $region9: #{tpu_custom_call.1} parent=5 // pred_check
        _
      $region10: #{tpu_custom_call.1} parent=5 // pred_check_branch
        %357 = sbr.rel (%p354) target = $region12
      $region11: #{tpu_custom_call.1} parent=5 // pred_region
        %s358 = ssub.s32 %s30, 1
        // Predicated region
        $region13: #{tpu_custom_call.1} parent=11 // pred_check
          %p359 = pneg %p129
        $region14: #{tpu_custom_call.1} parent=11 // pred_check_branch
          %361 = sbr.rel (%p359) target = $region16
        $region15: #{tpu_custom_call.1} parent=11 // pred_region
          %363 = vsyncadd [#allocation13], 0
          %s364 = sshll.u32 %s3, 4
          %s365 = int_to_ptr.hbm [resolvable:$true] %s364
          %s366 = sshll.u32 [#allocation12], 4
          %s367 = int_to_ptr.vmem [resolvable:$true] %s366
          %372 = dma.hbm_to_vmem [thread:$0]  %s365, 512, %s367, [#allocation13], 128, 128, 8
        $region16: #{tpu_custom_call.1} parent=11 // pred_fallthru
          _
        // Predicated region
        $region17: #{tpu_custom_call.1} parent=11 // pred_check
          %p373 = pneg %p150
        $region18: #{tpu_custom_call.1} parent=11 // pred_check_branch
          %375 = sbr.rel (%p373) target = $region20
        $region19: #{tpu_custom_call.1} parent=11 // pred_region
          %377 = vsyncadd [#allocation13], 0
          %s378 = sshll.u32 %s4, 4
          %s379 = int_to_ptr.hbm [resolvable:$true] %s378
          %s380 = sshll.u32 [#allocation14], 4
          %s381 = int_to_ptr.vmem [resolvable:$true] %s380
          %386 = dma.hbm_to_vmem [thread:$0]  %s379, 512, %s381, [#allocation13], 128, 128, 8
        $region20: #{tpu_custom_call.1} parent=11 // pred_fallthru
          _
        // Predicated region
        $region21: #{tpu_custom_call.1} parent=11 // pred_check
          %p387 = pneg %p171
        $region22: #{tpu_custom_call.1} parent=11 // pred_check_branch
          %389 = sbr.rel (%p387) target = $region24
        $region23: #{tpu_custom_call.1} parent=11 // pred_region
          %391 = vsyncadd [#allocation16], 0
          %s392 = sshll.u32 %s5, 4
          %s393 = int_to_ptr.hbm [resolvable:$true] %s392
          %s394 = sshll.u32 [#allocation15], 4
          %s395 = int_to_ptr.vmem [resolvable:$true] %s394
          %400 = dma.hbm_to_vmem [thread:$0]  %s393, 512, %s395, [#allocation16], 128, 128, 8
        $region24: #{tpu_custom_call.1} parent=11 // pred_fallthru
          _
        // Predicated region
        $region25: #{tpu_custom_call.1} parent=11 // pred_check
          %p401 = pneg %p192
        $region26: #{tpu_custom_call.1} parent=11 // pred_check_branch
          %403 = sbr.rel (%p401) target = $region28
        $region27: #{tpu_custom_call.1} parent=11 // pred_region
          _
        $region28: #{tpu_custom_call.1} parent=11 // pred_fallthru
          _
        // Predicated region
        $region29: #{tpu_custom_call.1} parent=11 // pred_check
          %p404 = pneg %p213
        $region30: #{tpu_custom_call.1} parent=11 // pred_check_branch
          %406 = sbr.rel (%p404) target = $region32
        $region31: #{tpu_custom_call.1} parent=11 // pred_region
          _
        $region32: #{tpu_custom_call.1} parent=11 // pred_fallthru
          _
        // Predicated region
        $region33: #{tpu_custom_call.1} parent=11 // pred_check
          %p407 = pneg %p234
        $region34: #{tpu_custom_call.1} parent=11 // pred_check_branch
          %409 = sbr.rel (%p407) target = $region36
        $region35: #{tpu_custom_call.1} parent=11 // pred_region
          _
        $region36: #{tpu_custom_call.1} parent=11 // pred_fallthru
          _
        // Predicated region
        $region37: #{tpu_custom_call.1} parent=11 // pred_check
          %p410 = pneg %p255
        $region38: #{tpu_custom_call.1} parent=11 // pred_check_branch
          %412 = sbr.rel (%p410) target = $region40
        $region39: #{tpu_custom_call.1} parent=11 // pred_region
          %414 = vsyncadd [#allocation16], 0
          %s415 = sshll.u32 %s9, 4
          %s416 = int_to_ptr.hbm [resolvable:$true] %s415
          %s417 = sshll.u32 [#allocation17], 4
          %s418 = int_to_ptr.vmem [resolvable:$true] %s417
          %423 = dma.hbm_to_vmem [thread:$0]  %s416, 512, %s418, [#allocation16], 128, 128, 8
        $region40: #{tpu_custom_call.1} parent=11 // pred_fallthru
          _
        // Predicated region
        $region41: #{tpu_custom_call.1} parent=11 // pred_check
          %p424 = pneg %p276
        $region42: #{tpu_custom_call.1} parent=11 // pred_check_branch
          %426 = sbr.rel (%p424) target = $region44
        $region43: #{tpu_custom_call.1} parent=11 // pred_region
          _
        $region44: #{tpu_custom_call.1} parent=11 // pred_fallthru
          _
        // Predicated region
        $region45: #{tpu_custom_call.1} parent=11 // pred_check
          %p427 = pneg %p297
        $region46: #{tpu_custom_call.1} parent=11 // pred_check_branch
          %429 = sbr.rel (%p427) target = $region48
        $region47: #{tpu_custom_call.1} parent=11 // pred_region
          _
        $region48: #{tpu_custom_call.1} parent=11 // pred_fallthru
          _
        // Predicated region
        $region49: #{tpu_custom_call.1} parent=11 // pred_check
          %p430 = pneg %p318
        $region50: #{tpu_custom_call.1} parent=11 // pred_check_branch
          %432 = sbr.rel (%p430) target = $region52
        $region51: #{tpu_custom_call.1} parent=11 // pred_region
          _
        $region52: #{tpu_custom_call.1} parent=11 // pred_fallthru
          _
      $region12: #{tpu_custom_call.1} parent=5 // pred_fallthru
        _
      %p433 = scmp.lt.s32.totalorder %s30, 2
      // Predicated region
      $region53: #{tpu_custom_call.1} parent=5 // pred_check
        %p434 = pneg %p433
      $region54: #{tpu_custom_call.1} parent=5 // pred_check_branch
        %436 = sbr.rel (%p434) target = $region56
      $region55: #{tpu_custom_call.1} parent=5 // pred_region
        // Predicated region
        $region57: #{tpu_custom_call.1} parent=55 // pred_check
          %p437 = pneg %p50
        $region58: #{tpu_custom_call.1} parent=55 // pred_check_branch
          %439 = sbr.rel (%p437) target = $region60
        $region59: #{tpu_custom_call.1} parent=55 // pred_region
          %s440 = sand.u32 %s40, 1
          %s441 = scalar_lea.sflag [#allocation7], %s440
          %s442 = sand.u32 %s40, 1
          %s443 = smul.addr %s442, 8
          %s444 = scalar_lea.vmem [#allocation6], %s443
          %446 = vsyncadd %s441, 0
          %s447 = smul.addr %s30, 8
          %s448 = scalar_lea.hbm %s0, %s447
          %s450 = sshll.u32 %s448, 4
          %s451 = int_to_ptr.hbm [resolvable:$true] %s450
          %s452 = sshll.u32 %s444, 4
          %s453 = int_to_ptr.vmem [resolvable:$true] %s452
          %455 = dma.hbm_to_vmem [thread:$0]  %s451, 128, %s453, %s441
        $region60: #{tpu_custom_call.1} parent=55 // pred_fallthru
          _
        // Predicated region
        $region61: #{tpu_custom_call.1} parent=55 // pred_check
          %p456 = pneg %p76
        $region62: #{tpu_custom_call.1} parent=55 // pred_check_branch
          %458 = sbr.rel (%p456) target = $region64
        $region63: #{tpu_custom_call.1} parent=55 // pred_region
          %s459 = sand.u32 %s30, 1
          %s460 = scalar_lea.sflag [#allocation10], %s459
          %s461 = sand.u32 %s66, 1
          %s462 = smul.addr %s461, 8
          %s463 = scalar_lea.vmem [#allocation9], %s462
          %465 = vsyncadd %s460, 0
          %s466 = smul.addr %s30, 8
          %s467 = scalar_lea.hbm %s1, %s466
          %s469 = sshll.u32 %s467, 4
          %s470 = int_to_ptr.hbm [resolvable:$true] %s469
          %s471 = sshll.u32 %s463, 4
          %s472 = int_to_ptr.vmem [resolvable:$true] %s471
          %474 = dma.hbm_to_vmem [thread:$0]  %s470, 128, %s472, %s460
        $region64: #{tpu_custom_call.1} parent=55 // pred_fallthru
          _
        // Predicated region
        $region65: #{tpu_custom_call.1} parent=55 // pred_check
          %p475 = pneg %p102
        $region66: #{tpu_custom_call.1} parent=55 // pred_check_branch
          %477 = sbr.rel (%p475) target = $region68
        $region67: #{tpu_custom_call.1} parent=55 // pred_region
          %s478 = sand.u32 %s30, 1
          %s479 = scalar_lea.sflag [#allocation10], %s478
          %s480 = sand.u32 %s92, 1
          %s481 = smul.addr %s480, 8
          %s482 = scalar_lea.vmem [#allocation11], %s481
          %484 = vsyncadd %s479, 0
          %s485 = smul.addr %s30, 8
          %s486 = scalar_lea.hbm %s2, %s485
          %s488 = sshll.u32 %s486, 4
          %s489 = int_to_ptr.hbm [resolvable:$true] %s488
          %s490 = sshll.u32 %s482, 4
          %s491 = int_to_ptr.vmem [resolvable:$true] %s490
          %493 = dma.hbm_to_vmem [thread:$0]  %s489, 128, %s491, %s479
        $region68: #{tpu_custom_call.1} parent=55 // pred_fallthru
          _
      $region56: #{tpu_custom_call.1} parent=5 // pred_fallthru
        _
      %p494 = scmp.le.s32.totalorder 1, %s30
      %p495 = scmp.lt.s32.totalorder %s30, 3
      %p496 = pnand %p494, %p495
      %p497 = pneg %p496
      // Predicated region
      $region69: #{tpu_custom_call.1} parent=5 // pred_check
        _
      $region70: #{tpu_custom_call.1} parent=5 // pred_check_branch
        %499 = sbr.rel (%p496) target = $region72
      $region71: #{tpu_custom_call.1} parent=5 // pred_region
        %s500 = ssub.s32 %s30, 1
        %s501 = sand.u32 %s43, 1
        %s502 = scalar_lea.sflag [#allocation7], %s501
        %s503 = sand.u32 %s43, 1
        %s504 = smul.addr %s503, 8
        %s505 = scalar_lea.vmem [#allocation6], %s504
        // Predicated region
        $region73: #{tpu_custom_call.1} parent=71 // pred_check
          %p506 = pneg %p56
        $region74: #{tpu_custom_call.1} parent=71 // pred_check_branch
          %508 = sbr.rel (%p506) target = $region76
        $region75: #{tpu_custom_call.1} parent=71 // pred_region
          %510 = dma.done %s502, 128
        $region76: #{tpu_custom_call.1} parent=71 // pred_fallthru
          _
        %s511 = sand.u32 %s35, 1
        %s512 = scalar_lea.sflag [#allocation10], %s511
        %s513 = sand.u32 %s69, 1
        %s514 = smul.addr %s513, 8
        %s515 = scalar_lea.vmem [#allocation9], %s514
        // Predicated region
        $region77: #{tpu_custom_call.1} parent=71 // pred_check
          %p516 = pneg %p82
        $region78: #{tpu_custom_call.1} parent=71 // pred_check_branch
          %518 = sbr.rel (%p516) target = $region80
        $region79: #{tpu_custom_call.1} parent=71 // pred_region
          %520 = dma.done %s512, 128
        $region80: #{tpu_custom_call.1} parent=71 // pred_fallthru
          _
        %s521 = sand.u32 %s35, 1
        %s522 = scalar_lea.sflag [#allocation10], %s521
        %s523 = sand.u32 %s95, 1
        %s524 = smul.addr %s523, 8
        %s525 = scalar_lea.vmem [#allocation11], %s524
        // Predicated region
        $region81: #{tpu_custom_call.1} parent=71 // pred_check
          %p526 = pneg %p108
        $region82: #{tpu_custom_call.1} parent=71 // pred_check_branch
          %528 = sbr.rel (%p526) target = $region84
        $region83: #{tpu_custom_call.1} parent=71 // pred_region
          %530 = dma.done %s522, 128
        $region84: #{tpu_custom_call.1} parent=71 // pred_fallthru
          _
        // Predicated region
        $region85: #{tpu_custom_call.1} parent=71 // pred_check
          %p531 = pneg %p129
        $region86: #{tpu_custom_call.1} parent=71 // pred_check_branch
          %533 = sbr.rel (%p531) target = $region88
        $region87: #{tpu_custom_call.1} parent=71 // pred_region
          %535 = dma.done [#allocation13], 512
        $region88: #{tpu_custom_call.1} parent=71 // pred_fallthru
          _
        // Predicated region
        $region89: #{tpu_custom_call.1} parent=71 // pred_check
          %p536 = pneg %p150
        $region90: #{tpu_custom_call.1} parent=71 // pred_check_branch
          %538 = sbr.rel (%p536) target = $region92
        $region91: #{tpu_custom_call.1} parent=71 // pred_region
          %540 = dma.done [#allocation13], 512
        $region92: #{tpu_custom_call.1} parent=71 // pred_fallthru
          _
        // Predicated region
        $region93: #{tpu_custom_call.1} parent=71 // pred_check
          %p541 = pneg %p171
        $region94: #{tpu_custom_call.1} parent=71 // pred_check_branch
          %543 = sbr.rel (%p541) target = $region96
        $region95: #{tpu_custom_call.1} parent=71 // pred_region
          %545 = dma.done [#allocation16], 512
        $region96: #{tpu_custom_call.1} parent=71 // pred_fallthru
          _
        // Predicated region
        $region97: #{tpu_custom_call.1} parent=71 // pred_check
          %p546 = pneg %p255
        $region98: #{tpu_custom_call.1} parent=71 // pred_check_branch
          %548 = sbr.rel (%p546) target = $region100
        $region99: #{tpu_custom_call.1} parent=71 // pred_region
          %550 = dma.done [#allocation16], 512
        $region100: #{tpu_custom_call.1} parent=71 // pred_fallthru
          _
        %s551 = sand.u32 %s43, 1
        %s552 = scalar_lea.sflag [#allocation7], %s551
        %s553 = sand.u32 %s43, 1
        %s554 = smul.addr %s553, 8
        %s555 = scalar_lea.vmem [#allocation6], %s554
        %p556 = pneg %p56
        %p557 = pneg %p53
        %s558 = sand.u32 %s35, 1
        %s559 = scalar_lea.sflag [#allocation10], %s558
        %s560 = sand.u32 %s69, 1
        %s561 = smul.addr %s560, 8
        %s562 = scalar_lea.vmem [#allocation9], %s561
        %p563 = pneg %p82
        %p564 = pneg %p79
        %s565 = sand.u32 %s35, 1
        %s566 = scalar_lea.sflag [#allocation10], %s565
        %s567 = sand.u32 %s95, 1
        %s568 = smul.addr %s567, 8
        %s569 = scalar_lea.vmem [#allocation11], %s568
        %p570 = pneg %p108
        %p571 = pneg %p105
        %p572 = pneg %p129
        %p573 = pneg %p126
        %p574 = pneg %p150
        %p575 = pneg %p147
        %p576 = pneg %p171
        %p577 = pneg %p168
        %p578 = pneg %p192
        %p579 = pneg %p189
        %p580 = pneg %p213
        %p581 = pneg %p210
        %p582 = pneg %p234
        %p583 = pneg %p231
        %p584 = pneg %p255
        %p585 = pneg %p252
        %p586 = pneg %p276
        %p587 = pneg %p273
        %p588 = pneg %p297
        %p589 = pneg %p294
        %p590 = pneg %p318
        %p591 = pneg %p315
        %p592 = pneg %p344
        %p593 = pneg %p341
        %s594 = sand.u32 %s331, 1
        %s595 = scalar_lea.sflag [#allocation8], %s594
        %s596 = sand.u32 %s331, 1
        %s597 = smul.addr %s596, 8
        %s598 = scalar_lea.vmem [#allocation18], %s597
        %v599 = vld [vmem:[%s505] sm:$0xff]
        %v600 = vld [vmem:[#allocation12] sm:$0xff]
        %v601 = vld [vmem:[#allocation12 + $0x8] sm:$0xff]
        %v602 = vld [vmem:[#allocation12 + $0x10] sm:$0xff]
        %v603 = vld [vmem:[#allocation12 + $0x18] sm:$0xff]
        %v604 = vld [vmem:[%s6] sm:$0x1]
        %v606 = vperm.slane %v604, 0
        %vm608 = vcmask 261120
        %v610 = vsel %vm608, %v599, 0
        %612 = vmatpush.msra.mxu0 0.0
        %613 = vmatpush.msra.mxu0 0.0
        %614 = vmatpush.msra.mxu0 0.0
        %615 = vmatpush.msra.mxu0 0.0
        %616 = vmatpush.msra.mxu0 0.0
        %617 = vmatpush.msra.mxu0 0.0
        %618 = vmatpush.msra.mxu0 0.0
        %619 = vmatpush.msra.mxu0 0.0
        %620 = vmatpush.msra.mxu0 0.0
        %621 = vmatpush.msra.mxu0 0.0
        %622 = vmatpush.msra.mxu0 0.0
        %623 = vmatpush.msra.mxu0 0.0
        %624 = vmatpush.msra.mxu0 %v603
        %625 = vmatpush.msra.mxu0 %v602
        %626 = vmatpush.msra.mxu0 %v601
        %627 = vmatpush.msra.mxu0 %v600
        %628 = vmatmul.f32.gmra.mxu0 %v610
        %v629 = vpop.f32.mrf.mxu0
        %v630 = vadd.f32 %v606, %v629
        %631 = vdwg.mxu0
        %v632 = vmul.f32 %v630, 0.35355338
        %633 = vst.msk [vmem:[#allocation2] sm:$0xff] %vm608, %v632
        %v634 = vld [vmem:[%s515] sm:$0xff]
        %v635 = vld [vmem:[#allocation14] sm:$0xff]
        %v636 = vld [vmem:[#allocation14 + $0x8] sm:$0xff]
        %v637 = vld [vmem:[#allocation14 + $0x10] sm:$0xff]
        %v638 = vld [vmem:[#allocation14 + $0x18] sm:$0xff]
        %v639 = vld [vmem:[%s7] sm:$0x1]
        %v641 = vperm.slane %v639, 0
        %v644 = vsel %vm608, %v634, 0
        %646 = vmatpush.msra.mxu0 0.0
        %647 = vmatpush.msra.mxu0 0.0
        %648 = vmatpush.msra.mxu0 0.0
        %649 = vmatpush.msra.mxu0 0.0
        %650 = vmatpush.msra.mxu0 0.0
        %651 = vmatpush.msra.mxu0 0.0
        %652 = vmatpush.msra.mxu0 0.0
        %653 = vmatpush.msra.mxu0 0.0
        %654 = vmatpush.msra.mxu0 0.0
        %655 = vmatpush.msra.mxu0 0.0
        %656 = vmatpush.msra.mxu0 0.0
        %657 = vmatpush.msra.mxu0 0.0
        %658 = vmatpush.msra.mxu0 %v638
        %659 = vmatpush.msra.mxu0 %v637
        %660 = vmatpush.msra.mxu0 %v636
        %661 = vmatpush.msra.mxu0 %v635
        %662 = vmatmul.f32.gmra.mxu0 %v644
        %v663 = vpop.f32.mrf.mxu0
        %v664 = vadd.f32 %v641, %v663
        %665 = vdwg.mxu0
        %666 = vst.msk [vmem:[#allocation3] sm:$0xff] %vm608, %v664
        %v667 = vld [vmem:[%s525] sm:$0xff]
        %v668 = vld [vmem:[#allocation15] sm:$0xff]
        %v669 = vld [vmem:[#allocation15 + $0x8] sm:$0xff]
        %v670 = vld [vmem:[#allocation15 + $0x10] sm:$0xff]
        %v671 = vld [vmem:[#allocation15 + $0x18] sm:$0xff]
        %v672 = vld [vmem:[%s8] sm:$0x1]
        %v674 = vperm.slane %v672, 0
        %v677 = vsel %vm608, %v667, 0
        %679 = vmatpush.msra.mxu0 0.0
        %680 = vmatpush.msra.mxu0 0.0
        %681 = vmatpush.msra.mxu0 0.0
        %682 = vmatpush.msra.mxu0 0.0
        %683 = vmatpush.msra.mxu0 0.0
        %684 = vmatpush.msra.mxu0 0.0
        %685 = vmatpush.msra.mxu0 0.0
        %686 = vmatpush.msra.mxu0 0.0
        %687 = vmatpush.msra.mxu0 0.0
        %688 = vmatpush.msra.mxu0 0.0
        %689 = vmatpush.msra.mxu0 0.0
        %690 = vmatpush.msra.mxu0 0.0
        %691 = vmatpush.msra.mxu0 %v671
        %692 = vmatpush.msra.mxu0 %v670
        %693 = vmatpush.msra.mxu0 %v669
        %694 = vmatpush.msra.mxu0 %v668
        %695 = vmatmul.f32.gmra.mxu0 %v677
        %v696 = vpop.f32.mrf.mxu0
        %v697 = vadd.f32 %v674, %v696
        %698 = vdwg.mxu0
        %699 = vst.msk [vmem:[#allocation4] sm:$0xff] %vm608, %v697
        %v700 = vld [vmem:[%s505] sm:$0xff]
        %v701 = vld [vmem:[%s10] sm:$0x1]
        %v703 = vperm.slane %v701, 0
        %v705 = vadd.f32 %v700, %v703
        %706 = vst.msk [vmem:[#allocation5] sm:$0xff] %vm608, %v705
        %v707 = vld [vmem:[#allocation2] sm:$0xff]
        %v708 = vld [vmem:[#allocation3] sm:$0xff]
        %v709 = vld [vmem:[#allocation4] sm:$0xff]
        %vm710 = vcmask 64512
        %v712 = vsel %vm710, %v707, 0
        %v715 = vsel %vm710, %v708, 0
        %717 = vmatpush.xpose.msra.mxu0 0.0
        %718 = vmatpush.xpose.msra.mxu0 0.0
        %719 = vmatpush.xpose.msra.mxu0 0.0
        %720 = vmatpush.xpose.msra.mxu0 0.0
        %721 = vmatpush.xpose.msra.mxu0 0.0
        %722 = vmatpush.xpose.msra.mxu0 0.0
        %723 = vmatpush.xpose.msra.mxu0 0.0
        %724 = vmatpush.xpose.msra.mxu0 0.0
        %725 = vmatpush.xpose.msra.mxu0 0.0
        %726 = vmatpush.xpose.msra.mxu0 0.0
        %727 = vmatpush.xpose.msra.mxu0 0.0
        %728 = vmatpush.xpose.msra.mxu0 0.0
        %729 = vmatpush.xpose.msra.mxu0 0.0
        %730 = vmatpush.xpose.msra.mxu0 0.0
        %731 = vmatpush.xpose.msra.mxu0 0.0
        %732 = vmatpush.xpose.msra.mxu0 %v715
        %733 = vmatmul.f32.gmra.mxu0 %v712
        %v734 = vpop.f32.mrf.mxu0
        %v735 = vadd.f32 0.0, %v734
        %736 = vdwg.mxu0
        %v737 = vsel %vm710, %v735, -inf
        %738 = vmax.xlane.f32.xlu0 %v737
        %v739 = vpop.xlane.xlu0 %738
        %v740 = vsub.f32 %v735, %v739
        %v741 = vmul.f32 %v740, 1.442695
        %v742 = vpow.pop %v741
        %v743 = vsel %vm710, %v742, 0.0
        %744 = vadd.xlane.f32.xlu0 %v743
        %v745 = vpop.xlane.xlu0 %744
        %v746 = vrcp.pop %v745
        %v747 = vmul.f32 %v745, %v746
        %v748 = vsub.f32 1.0, %v747
        %v749 = vmul.f32 %v746, %v748
        %v750 = vadd.f32 %v746, %v749
        %vm751 = vweird.f32 %v745
        %vm752 = vweird.f32 %v746
        %vm753 = vmor %vm751, %vm752
        %v754 = vsel %vm753, %v746, %v750
        %v755 = vand.u32 2147483647, %v745
        %vm756 = vcmp.eq.f32.partialorder %v755, 8.507059e+37
        %v757 = vand.u32 %v745, 2147483648
        %v758 = vor.u32 1.1754944e-38, %v757
        %v759 = vsel %vm756, %v758, %v754
        %v760 = vmul.f32 %v742, %v759
        %v762 = vsel %vm710, %v760, 0
        %764 = vmatpush.msra.mxu0 0.0
        %765 = vmatpush.msra.mxu0 0.0
        %766 = vmatpush.msra.mxu0 0.0
        %767 = vmatpush.msra.mxu0 0.0
        %768 = vmatpush.msra.mxu0 0.0
        %769 = vmatpush.msra.mxu0 0.0
        %770 = vmatpush.msra.mxu0 0.0
        %771 = vmatpush.msra.mxu0 0.0
        %772 = vmatpush.msra.mxu0 0.0
        %773 = vmatpush.msra.mxu0 0.0
        %774 = vmatpush.msra.mxu0 0.0
        %775 = vmatpush.msra.mxu0 0.0
        %776 = vmatpush.msra.mxu0 0.0
        %777 = vmatpush.msra.mxu0 0.0
        %778 = vmatpush.msra.mxu0 0.0
        %779 = vmatpush.msra.mxu0 %v709
        %780 = vmatmul.f32.gmra.mxu0 %v762
        %v781 = vpop.f32.mrf.mxu0
        %v782 = vadd.f32 0.0, %v781
        %783 = vdwg.mxu0
        %v784 = vld [vmem:[#allocation17] sm:$0xff]
        %v786 = vsel %vm710, %v782, 0
        %788 = vmatpush.msra.mxu0 0.0
        %789 = vmatpush.msra.mxu0 0.0
        %790 = vmatpush.msra.mxu0 0.0
        %791 = vmatpush.msra.mxu0 0.0
        %792 = vmatpush.msra.mxu0 0.0
        %793 = vmatpush.msra.mxu0 0.0
        %794 = vmatpush.msra.mxu0 0.0
        %795 = vmatpush.msra.mxu0 0.0
        %796 = vmatpush.msra.mxu0 0.0
        %797 = vmatpush.msra.mxu0 0.0
        %798 = vmatpush.msra.mxu0 0.0
        %799 = vmatpush.msra.mxu0 0.0
        %800 = vmatpush.msra.mxu0 0.0
        %801 = vmatpush.msra.mxu0 0.0
        %802 = vmatpush.msra.mxu0 0.0
        %803 = vmatpush.msra.mxu0 %v784
        %804 = vmatmul.f32.gmra.mxu0 %v786
        %v805 = vpop.f32.mrf.mxu0
        %v806 = vadd.f32 0.0, %v805
        %807 = vdwg.mxu0
        %v808 = vld [vmem:[#allocation5] sm:$0xff]
        %v809 = vadd.f32 %v808, %v806
        %810 = vst.msk [vmem:[#allocation5] sm:$0xff] %vm608, %v809
        %v811 = vld [vmem:[#allocation2] sm:$0xff]
        %v812 = vld [vmem:[#allocation3] sm:$0xff]
        %v813 = vld [vmem:[#allocation4] sm:$0xff]
        %815 = vrot.lane.b32.xlu0 %v811, 120
        %v816 = vpop.permute.xlu0 %815
        %818 = vrot.lane.b32.xlu0 %v812, 120
        %v819 = vpop.permute.xlu0 %818
        %v820 = vsel %vm710, %v816, 0
        %v822 = vsel %vm710, %v819, 0
        %824 = vmatpush.xpose.msra.mxu0 0.0
        %825 = vmatpush.xpose.msra.mxu0 0.0
        %826 = vmatpush.xpose.msra.mxu0 0.0
        %827 = vmatpush.xpose.msra.mxu0 0.0
        %828 = vmatpush.xpose.msra.mxu0 0.0
        %829 = vmatpush.xpose.msra.mxu0 0.0
        %830 = vmatpush.xpose.msra.mxu0 0.0
        %831 = vmatpush.xpose.msra.mxu0 0.0
        %832 = vmatpush.xpose.msra.mxu0 0.0
        %833 = vmatpush.xpose.msra.mxu0 0.0
        %834 = vmatpush.xpose.msra.mxu0 0.0
        %835 = vmatpush.xpose.msra.mxu0 0.0
        %836 = vmatpush.xpose.msra.mxu0 0.0
        %837 = vmatpush.xpose.msra.mxu0 0.0
        %838 = vmatpush.xpose.msra.mxu0 0.0
        %839 = vmatpush.xpose.msra.mxu0 %v822
        %840 = vmatmul.f32.gmra.mxu0 %v820
        %v841 = vpop.f32.mrf.mxu0
        %v842 = vadd.f32 0.0, %v841
        %843 = vdwg.mxu0
        %v844 = vsel %vm710, %v842, -inf
        %845 = vmax.xlane.f32.xlu0 %v844
        %v846 = vpop.xlane.xlu0 %845
        %v847 = vsub.f32 %v842, %v846
        %v848 = vmul.f32 %v847, 1.442695
        %v849 = vpow.pop %v848
        %v850 = vsel %vm710, %v849, 0.0
        %851 = vadd.xlane.f32.xlu0 %v850
        %v852 = vpop.xlane.xlu0 %851
        %v853 = vrcp.pop %v852
        %v854 = vmul.f32 %v852, %v853
        %v855 = vsub.f32 1.0, %v854
        %v856 = vmul.f32 %v853, %v855
        %v857 = vadd.f32 %v853, %v856
        %vm858 = vweird.f32 %v852
        %vm859 = vweird.f32 %v853
        %vm860 = vmor %vm858, %vm859
        %v861 = vsel %vm860, %v853, %v857
        %v862 = vand.u32 2147483647, %v852
        %vm863 = vcmp.eq.f32.partialorder %v862, 8.507059e+37
        %v864 = vand.u32 %v852, 2147483648
        %v865 = vor.u32 1.1754944e-38, %v864
        %v866 = vsel %vm863, %v865, %v861
        %v867 = vmul.f32 %v849, %v866
        %869 = vrot.lane.b32.xlu0 %v813, 120
        %v870 = vpop.permute.xlu0 %869
        %v873 = vsel %vm710, %v867, 0
        %875 = vmatpush.msra.mxu0 0.0
        %876 = vmatpush.msra.mxu0 0.0
        %877 = vmatpush.msra.mxu0 0.0
        %878 = vmatpush.msra.mxu0 0.0
        %879 = vmatpush.msra.mxu0 0.0
        %880 = vmatpush.msra.mxu0 0.0
        %881 = vmatpush.msra.mxu0 0.0
        %882 = vmatpush.msra.mxu0 0.0
        %883 = vmatpush.msra.mxu0 0.0
        %884 = vmatpush.msra.mxu0 0.0
        %885 = vmatpush.msra.mxu0 0.0
        %886 = vmatpush.msra.mxu0 0.0
        %887 = vmatpush.msra.mxu0 0.0
        %888 = vmatpush.msra.mxu0 0.0
        %889 = vmatpush.msra.mxu0 0.0
        %890 = vmatpush.msra.mxu0 %v870
        %891 = vmatmul.f32.gmra.mxu0 %v873
        %v892 = vpop.f32.mrf.mxu0
        %v893 = vadd.f32 0.0, %v892
        %894 = vdwg.mxu0
        %v895 = vld [vmem:[#allocation17 + $0x8] sm:$0xff]
        %v897 = vsel %vm710, %v893, 0
        %899 = vmatpush.msra.mxu0 0.0
        %900 = vmatpush.msra.mxu0 0.0
        %901 = vmatpush.msra.mxu0 0.0
        %902 = vmatpush.msra.mxu0 0.0
        %903 = vmatpush.msra.mxu0 0.0
        %904 = vmatpush.msra.mxu0 0.0
        %905 = vmatpush.msra.mxu0 0.0
        %906 = vmatpush.msra.mxu0 0.0
        %907 = vmatpush.msra.mxu0 0.0
        %908 = vmatpush.msra.mxu0 0.0
        %909 = vmatpush.msra.mxu0 0.0
        %910 = vmatpush.msra.mxu0 0.0
        %911 = vmatpush.msra.mxu0 0.0
        %912 = vmatpush.msra.mxu0 0.0
        %913 = vmatpush.msra.mxu0 0.0
        %914 = vmatpush.msra.mxu0 %v895
        %915 = vmatmul.f32.gmra.mxu0 %v897
        %v916 = vpop.f32.mrf.mxu0
        %v917 = vadd.f32 0.0, %v916
        %918 = vdwg.mxu0
        %v919 = vld [vmem:[#allocation5] sm:$0xff]
        %v920 = vadd.f32 %v919, %v917
        %921 = vst.msk [vmem:[#allocation5] sm:$0xff] %vm608, %v920
        %v922 = vld [vmem:[#allocation2] sm:$0xff]
        %v923 = vld [vmem:[#allocation3] sm:$0xff]
        %v924 = vld [vmem:[#allocation4] sm:$0xff]
        %926 = vrot.lane.b32.xlu0 %v922, 112
        %v927 = vpop.permute.xlu0 %926
        %929 = vrot.lane.b32.xlu0 %v923, 112
        %v930 = vpop.permute.xlu0 %929
        %v931 = vsel %vm710, %v927, 0
        %v933 = vsel %vm710, %v930, 0
        %935 = vmatpush.xpose.msra.mxu0 0.0
        %936 = vmatpush.xpose.msra.mxu0 0.0
        %937 = vmatpush.xpose.msra.mxu0 0.0
        %938 = vmatpush.xpose.msra.mxu0 0.0
        %939 = vmatpush.xpose.msra.mxu0 0.0
        %940 = vmatpush.xpose.msra.mxu0 0.0
        %941 = vmatpush.xpose.msra.mxu0 0.0
        %942 = vmatpush.xpose.msra.mxu0 0.0
        %943 = vmatpush.xpose.msra.mxu0 0.0
        %944 = vmatpush.xpose.msra.mxu0 0.0
        %945 = vmatpush.xpose.msra.mxu0 0.0
        %946 = vmatpush.xpose.msra.mxu0 0.0
        %947 = vmatpush.xpose.msra.mxu0 0.0
        %948 = vmatpush.xpose.msra.mxu0 0.0
        %949 = vmatpush.xpose.msra.mxu0 0.0
        %950 = vmatpush.xpose.msra.mxu0 %v933
        %951 = vmatmul.f32.gmra.mxu0 %v931
        %v952 = vpop.f32.mrf.mxu0
        %v953 = vadd.f32 0.0, %v952
        %954 = vdwg.mxu0
        %v955 = vsel %vm710, %v953, -inf
        %956 = vmax.xlane.f32.xlu0 %v955
        %v957 = vpop.xlane.xlu0 %956
        %v958 = vsub.f32 %v953, %v957
        %v959 = vmul.f32 %v958, 1.442695
        %v960 = vpow.pop %v959
        %v961 = vsel %vm710, %v960, 0.0
        %962 = vadd.xlane.f32.xlu0 %v961
        %v963 = vpop.xlane.xlu0 %962
        %v964 = vrcp.pop %v963
        %v965 = vmul.f32 %v963, %v964
        %v966 = vsub.f32 1.0, %v965
        %v967 = vmul.f32 %v964, %v966
        %v968 = vadd.f32 %v964, %v967
        %vm969 = vweird.f32 %v963
        %vm970 = vweird.f32 %v964
        %vm971 = vmor %vm969, %vm970
        %v972 = vsel %vm971, %v964, %v968
        %v973 = vand.u32 2147483647, %v963
        %vm974 = vcmp.eq.f32.partialorder %v973, 8.507059e+37
        %v975 = vand.u32 %v963, 2147483648
        %v976 = vor.u32 1.1754944e-38, %v975
        %v977 = vsel %vm974, %v976, %v972
        %v978 = vmul.f32 %v960, %v977
        %980 = vrot.lane.b32.xlu0 %v924, 112
        %v981 = vpop.permute.xlu0 %980
        %v984 = vsel %vm710, %v978, 0
        %986 = vmatpush.msra.mxu0 0.0
        %987 = vmatpush.msra.mxu0 0.0
        %988 = vmatpush.msra.mxu0 0.0
        %989 = vmatpush.msra.mxu0 0.0
        %990 = vmatpush.msra.mxu0 0.0
        %991 = vmatpush.msra.mxu0 0.0
        %992 = vmatpush.msra.mxu0 0.0
        %993 = vmatpush.msra.mxu0 0.0
        %994 = vmatpush.msra.mxu0 0.0
        %995 = vmatpush.msra.mxu0 0.0
        %996 = vmatpush.msra.mxu0 0.0
        %997 = vmatpush.msra.mxu0 0.0
        %998 = vmatpush.msra.mxu0 0.0
        %999 = vmatpush.msra.mxu0 0.0
        %1000 = vmatpush.msra.mxu0 0.0
        %1001 = vmatpush.msra.mxu0 %v981
        %1002 = vmatmul.f32.gmra.mxu0 %v984
        %v1003 = vpop.f32.mrf.mxu0
        %v1004 = vadd.f32 0.0, %v1003
        %1005 = vdwg.mxu0
        %v1006 = vld [vmem:[#allocation17 + $0x10] sm:$0xff]
        %v1008 = vsel %vm710, %v1004, 0
        %1010 = vmatpush.msra.mxu0 0.0
        %1011 = vmatpush.msra.mxu0 0.0
        %1012 = vmatpush.msra.mxu0 0.0
        %1013 = vmatpush.msra.mxu0 0.0
        %1014 = vmatpush.msra.mxu0 0.0
        %1015 = vmatpush.msra.mxu0 0.0
        %1016 = vmatpush.msra.mxu0 0.0
        %1017 = vmatpush.msra.mxu0 0.0
        %1018 = vmatpush.msra.mxu0 0.0
        %1019 = vmatpush.msra.mxu0 0.0
        %1020 = vmatpush.msra.mxu0 0.0
        %1021 = vmatpush.msra.mxu0 0.0
        %1022 = vmatpush.msra.mxu0 0.0
        %1023 = vmatpush.msra.mxu0 0.0
        %1024 = vmatpush.msra.mxu0 0.0
        %1025 = vmatpush.msra.mxu0 %v1006
        %1026 = vmatmul.f32.gmra.mxu0 %v1008
        %v1027 = vpop.f32.mrf.mxu0
        %v1028 = vadd.f32 0.0, %v1027
        %1029 = vdwg.mxu0
        %v1030 = vld [vmem:[#allocation5] sm:$0xff]
        %v1031 = vadd.f32 %v1030, %v1028
        %1032 = vst.msk [vmem:[#allocation5] sm:$0xff] %vm608, %v1031
        %v1033 = vld [vmem:[#allocation2] sm:$0xff]
        %v1034 = vld [vmem:[#allocation3] sm:$0xff]
        %v1035 = vld [vmem:[#allocation4] sm:$0xff]
        %1037 = vrot.lane.b32.xlu0 %v1033, 104
        %v1038 = vpop.permute.xlu0 %1037
        %1040 = vrot.lane.b32.xlu0 %v1034, 104
        %v1041 = vpop.permute.xlu0 %1040
        %v1042 = vsel %vm710, %v1038, 0
        %v1044 = vsel %vm710, %v1041, 0
        %1046 = vmatpush.xpose.msra.mxu0 0.0
        %1047 = vmatpush.xpose.msra.mxu0 0.0
        %1048 = vmatpush.xpose.msra.mxu0 0.0
        %1049 = vmatpush.xpose.msra.mxu0 0.0
        %1050 = vmatpush.xpose.msra.mxu0 0.0
        %1051 = vmatpush.xpose.msra.mxu0 0.0
        %1052 = vmatpush.xpose.msra.mxu0 0.0
        %1053 = vmatpush.xpose.msra.mxu0 0.0
        %1054 = vmatpush.xpose.msra.mxu0 0.0
        %1055 = vmatpush.xpose.msra.mxu0 0.0
        %1056 = vmatpush.xpose.msra.mxu0 0.0
        %1057 = vmatpush.xpose.msra.mxu0 0.0
        %1058 = vmatpush.xpose.msra.mxu0 0.0
        %1059 = vmatpush.xpose.msra.mxu0 0.0
        %1060 = vmatpush.xpose.msra.mxu0 0.0
        %1061 = vmatpush.xpose.msra.mxu0 %v1044
        %1062 = vmatmul.f32.gmra.mxu0 %v1042
        %v1063 = vpop.f32.mrf.mxu0
        %v1064 = vadd.f32 0.0, %v1063
        %1065 = vdwg.mxu0
        %v1066 = vsel %vm710, %v1064, -inf
        %1067 = vmax.xlane.f32.xlu0 %v1066
        %v1068 = vpop.xlane.xlu0 %1067
        %v1069 = vsub.f32 %v1064, %v1068
        %v1070 = vmul.f32 %v1069, 1.442695
        %v1071 = vpow.pop %v1070
        %v1072 = vsel %vm710, %v1071, 0.0
        %1073 = vadd.xlane.f32.xlu0 %v1072
        %v1074 = vpop.xlane.xlu0 %1073
        %v1075 = vrcp.pop %v1074
        %v1076 = vmul.f32 %v1074, %v1075
        %v1077 = vsub.f32 1.0, %v1076
        %v1078 = vmul.f32 %v1075, %v1077
        %v1079 = vadd.f32 %v1075, %v1078
        %vm1080 = vweird.f32 %v1074
        %vm1081 = vweird.f32 %v1075
        %vm1082 = vmor %vm1080, %vm1081
        %v1083 = vsel %vm1082, %v1075, %v1079
        %v1084 = vand.u32 2147483647, %v1074
        %vm1085 = vcmp.eq.f32.partialorder %v1084, 8.507059e+37
        %v1086 = vand.u32 %v1074, 2147483648
        %v1087 = vor.u32 1.1754944e-38, %v1086
        %v1088 = vsel %vm1085, %v1087, %v1083
        %v1089 = vmul.f32 %v1071, %v1088
        %1091 = vrot.lane.b32.xlu0 %v1035, 104
        %v1092 = vpop.permute.xlu0 %1091
        %v1095 = vsel %vm710, %v1089, 0
        %1097 = vmatpush.msra.mxu0 0.0
        %1098 = vmatpush.msra.mxu0 0.0
        %1099 = vmatpush.msra.mxu0 0.0
        %1100 = vmatpush.msra.mxu0 0.0
        %1101 = vmatpush.msra.mxu0 0.0
        %1102 = vmatpush.msra.mxu0 0.0
        %1103 = vmatpush.msra.mxu0 0.0
        %1104 = vmatpush.msra.mxu0 0.0
        %1105 = vmatpush.msra.mxu0 0.0
        %1106 = vmatpush.msra.mxu0 0.0
        %1107 = vmatpush.msra.mxu0 0.0
        %1108 = vmatpush.msra.mxu0 0.0
        %1109 = vmatpush.msra.mxu0 0.0
        %1110 = vmatpush.msra.mxu0 0.0
        %1111 = vmatpush.msra.mxu0 0.0
        %1112 = vmatpush.msra.mxu0 %v1092
        %1113 = vmatmul.f32.gmra.mxu0 %v1095
        %v1114 = vpop.f32.mrf.mxu0
        %v1115 = vadd.f32 0.0, %v1114
        %1116 = vdwg.mxu0
        %v1117 = vld [vmem:[#allocation17 + $0x18] sm:$0xff]
        %v1119 = vsel %vm710, %v1115, 0
        %1121 = vmatpush.msra.mxu0 0.0
        %1122 = vmatpush.msra.mxu0 0.0
        %1123 = vmatpush.msra.mxu0 0.0
        %1124 = vmatpush.msra.mxu0 0.0
        %1125 = vmatpush.msra.mxu0 0.0
        %1126 = vmatpush.msra.mxu0 0.0
        %1127 = vmatpush.msra.mxu0 0.0
        %1128 = vmatpush.msra.mxu0 0.0
        %1129 = vmatpush.msra.mxu0 0.0
        %1130 = vmatpush.msra.mxu0 0.0
        %1131 = vmatpush.msra.mxu0 0.0
        %1132 = vmatpush.msra.mxu0 0.0
        %1133 = vmatpush.msra.mxu0 0.0
        %1134 = vmatpush.msra.mxu0 0.0
        %1135 = vmatpush.msra.mxu0 0.0
        %1136 = vmatpush.msra.mxu0 %v1117
        %1137 = vmatmul.f32.gmra.mxu0 %v1119
        %v1138 = vpop.f32.mrf.mxu0
        %v1139 = vadd.f32 0.0, %v1138
        %1140 = vdwg.mxu0
        %v1141 = vld [vmem:[#allocation5] sm:$0xff]
        %v1142 = vadd.f32 %v1141, %v1139
        %1143 = vst.msk [vmem:[#allocation5] sm:$0xff] %vm608, %v1142
        %v1144 = vld [vmem:[#allocation5] sm:$0xff]
        %v1145 = vsel %vm608, %v1144, 0.0
        %1146 = vadd.xlane.f32.xlu0 %v1145
        %v1147 = vpop.xlane.xlu0 %1146
        %v1148 = vrcp.pop 32.0
        %v1149 = vmul.f32 32.0, %v1148
        %v1150 = vsub.f32 1.0, %v1149
        %v1151 = vmul.f32 %v1148, %v1150
        %v1152 = vadd.f32 %v1148, %v1151
        %vm1153 = vweird.f32 %v1148
        %v1154 = vsel %vm1153, %v1148, %v1152
        %v1155 = vmul.f32 %v1147, %v1154
        %v1156 = vsub.f32 %v1144, %v1155
        %v1157 = vmul.f32 %v1156, %v1156
        %v1158 = vsel %vm608, %v1157, 0.0
        %1159 = vadd.xlane.f32.xlu0 %v1158
        %v1160 = vpop.xlane.xlu0 %1159
        %v1161 = vmul.f32 %v1160, %v1154
        %v1162 = vadd.f32 %v1161, 1e-05
        %v1163 = vrsqrt.pop %v1162
        %v1164 = vmul.f32 %v1163, %v1162
        %v1165 = vmul.f32 %v1164, %v1163
        %v1166 = vmul.f32 0.5, %v1165
        %v1167 = vsub.f32 1.5, %v1166
        %v1168 = vmul.f32 %v1163, %v1167
        %vm1169 = vweird.f32 %v1162
        %vm1170 = vweird.f32 %v1163
        %vm1171 = vmor %vm1169, %vm1170
        %v1172 = vsel %vm1171, %v1163, %v1168
        %v1173 = vmul.f32 %v1156, %v1172
        %v1174 = vld [vmem:[%s11] sm:$0x1]
        %v1176 = vperm.slane %v1174, 0
        %v1178 = vmul.f32 %v1173, %v1176
        %v1179 = vld [vmem:[%s12] sm:$0x1]
        %v1181 = vperm.slane %v1179, 0
        %v1183 = vadd.f32 %v1178, %v1181
        %1184 = vst.msk [vmem:[%s598] sm:$0xff] %vm608, %v1183
        %s1185 = sand.u32 %s331, 1
        %s1186 = scalar_lea.sflag [#allocation8], %s1185
        %s1187 = sand.u32 %s331, 1
        %s1188 = smul.addr %s1187, 8
        %s1189 = scalar_lea.vmem [#allocation18], %s1188
        // Predicated region
        $region101: #{tpu_custom_call.1} parent=71 // pred_check
          %p1190 = pneg %p341
        $region102: #{tpu_custom_call.1} parent=71 // pred_check_branch
          %1192 = sbr.rel (%p1190) target = $region104
        $region103: #{tpu_custom_call.1} parent=71 // pred_region
          %1194 = vsyncadd %s1186, 0
          %s1195 = smul.addr %s35, 8
          %s1196 = scalar_lea.hbm %s13, %s1195
          %s1198 = sshll.u32 %s1189, 4
          %s1199 = int_to_ptr.vmem [resolvable:$true] %s1198
          %s1200 = sshll.u32 %s1196, 4
          %s1201 = int_to_ptr.hbm [resolvable:$true] %s1200
          %1203 = dma.vmem_to_hbm [thread:$0]  %s1199, 128, %s1201, %s1186
        $region104: #{tpu_custom_call.1} parent=71 // pred_fallthru
          _
      $region72: #{tpu_custom_call.1} parent=5 // pred_fallthru
        _
      %p1204 = scmp.le.s32.totalorder 2, %s30
      // Predicated region
      $region105: #{tpu_custom_call.1} parent=5 // pred_check
        %p1205 = pneg %p1204
      $region106: #{tpu_custom_call.1} parent=5 // pred_check_branch
        %1207 = sbr.rel (%p1205) target = $region108
      $region107: #{tpu_custom_call.1} parent=5 // pred_region
        %s1208 = ssub.s32 %s30, 2
        // Predicated region
        $region109: #{tpu_custom_call.1} parent=107 // pred_check
          %p1209 = pneg %p347
        $region110: #{tpu_custom_call.1} parent=107 // pred_check_branch
          %1211 = sbr.rel (%p1209) target = $region112
        $region111: #{tpu_custom_call.1} parent=107 // pred_region
          %s1212 = sand.u32 %s332, 1
          %s1213 = scalar_lea.sflag [#allocation8], %s1212
          %s1214 = sand.u32 %s332, 1
          %s1215 = smul.addr %s1214, 8
          %s1216 = scalar_lea.vmem [#allocation18], %s1215
          %1218 = dma.done %s1213, 128
        $region112: #{tpu_custom_call.1} parent=107 // pred_fallthru
          _
      $region108: #{tpu_custom_call.1} parent=5 // pred_fallthru
        _
    $region6: #{tpu_custom_call.1} parent=1 // loop_footer
      %s34 = sadd.s32 1, %s30
    $region7: #{tpu_custom_call.1} parent=1 // loop_footer_branch
      %29 = sbr.rel target = $region3
    $region8: #{tpu_custom_call.1} parent=1 // loop_exit
      _
    %1219 = vsyncpa [#allocation7], 1
    %s1220 = scalar_lea.sflag [#allocation7], 1
    %1221 = vsyncpa %s1220, 1
    %1222 = vsyncpa [#allocation10], 1
    %s1223 = scalar_lea.sflag [#allocation10], 1
    %1224 = vsyncpa %s1223, 1
    %1225 = vsyncpa [#allocation13], 1
    %1226 = vsyncpa [#allocation16], 1
    %1227 = vsyncpa [#allocation8], 1
    %s1228 = scalar_lea.sflag [#allocation8], 1
    %1229 = vsyncpa %s1228, 1

</llo_original>
